<compile_context>
chip_gen: v7x
topology: tpu7x:2x2x1
jax: 0.10.0
libtpu: 0.0.40
codegen_flags: <defaults>
</compile_context>

<pallas_src>
import functools

import jax
import jax.numpy as jnp
from jax.experimental import pallas as pl
from jax.experimental.pallas import tpu as pltpu

N_EMBD = 64
BLOCK_SIZE = 32          # max context length
N_HEAD = 4
HEAD_SIZE = N_EMBD // N_HEAD
HIDDEN = 4 * N_EMBD
LN_EPS = 1e-5
NEG_BIG = -1e30          # large finite negative mask (avoids inf - inf)


def _layer_norm(x, w, b):
    # One-pass stats (mean and mean-of-squares) -> fewer lane reductions.
    mu = jnp.mean(x, axis=-1, keepdims=True)
    ms = jnp.mean(x * x, axis=-1, keepdims=True)
    var = ms - mu * mu
    return (x - mu) * jax.lax.rsqrt(var + LN_EPS) * w + b


def block_kernel(x_ref, mask_ref,
                 ln1_w_ref, ln1_b_ref,
                 wqkv_ref, wproj_ref, bproj_ref,
                 ln2_w_ref, ln2_b_ref,
                 w1_ref, b1_ref, w2_ref, b2_ref,
                 o_ref, *, bb, seq_len):
    C = N_EMBD
    mm_dt = wqkv_ref.dtype          # matmul-operand dtype (bf16 fast path / f32)
    x = x_ref[...]                  # (bb*T, C) packed tokens, f32

    # ---------------- self-attention branch: sa(ln1(x)) ----------------
    xn = _layer_norm(x, ln1_w_ref[...], ln1_b_ref[...])
    # Fused QKV projection; 1/sqrt(d) scale is pre-folded into Wq by the wrapper.
    qkv = jnp.dot(xn.astype(mm_dt), wqkv_ref[...],
                  preferred_element_type=jnp.float32)
    q = qkv[:, 0 * C:1 * C].reshape(bb, seq_len, C)
    k = qkv[:, 1 * C:2 * C].reshape(bb, seq_len, C)
    v = qkv[:, 2 * C:3 * C].reshape(bb, seq_len, C)

    mask = mask_ref[...]            # (T, T) additive causal bias, resident

    # TODO(synk): the per-head loop with lane slices remains because Mosaic does
    # not reliably lower dot_general with two batch dims / 4-D transposes; the
    # attention matmuls are a small fraction of total FLOPs (QKV/proj/MLP dominate).
    head_outs = []
    for h in range(N_HEAD):          # static unroll; each op batched over bb
        sl = slice(h * HEAD_SIZE, (h + 1) * HEAD_SIZE)
        qh = q[..., sl].astype(mm_dt)
        kh = k[..., sl].astype(mm_dt)
        vh = v[..., sl].astype(mm_dt)
        wei = jnp.einsum('bqd,bkd->bqk', qh, kh,
                         preferred_element_type=jnp.float32)
        wei = wei + mask             # implicit broadcast; no (bb,T,T) temp write
        wei = wei - jnp.max(wei, axis=-1, keepdims=True)
        p = jnp.exp(wei)
        p = p * pl.reciprocal(jnp.sum(p, axis=-1, keepdims=True), approx=True)
        # TODO(synk): nn.Dropout(p=0.5) on attention weights is identity here
        # (eval-mode semantics).
        head_outs.append(jnp.einsum('bqk,bkd->bqd', p.astype(mm_dt), vh,
                                    preferred_element_type=jnp.float32))

    sa = jnp.concatenate(head_outs, axis=-1).reshape(bb * seq_len, C)
    sa = jnp.dot(sa.astype(mm_dt), wproj_ref[...],
                 preferred_element_type=jnp.float32) + bproj_ref[...]

    x = x + sa                                        # first residual (f32)

    # ---------------- feed-forward branch: ffwd(ln2(x)) ----------------
    xn2 = _layer_norm(x, ln2_w_ref[...], ln2_b_ref[...])
    hdn = jnp.dot(xn2.astype(mm_dt), w1_ref[...],
                  preferred_element_type=jnp.float32) + b1_ref[...]      # (M, 4C)
    hdn = jnp.maximum(hdn, 0.0)
    ff = jnp.dot(hdn.astype(mm_dt), w2_ref[...],
                 preferred_element_type=jnp.float32) + b2_ref[...]       # (M, C)
    # TODO(synk): nn.Dropout on proj / MLP outputs is identity (eval mode).

    o_ref[...] = (x + ff).astype(o_ref.dtype)         # second residual


def _pick_batch_tile(B, cap=64):
    """Batch elements per grid step.

    cap=64 keeps the per-step working set comfortably inside v7x's 64 MiB VMEM
    (and v5e's 16 MiB default scoped limit); (B+1)//2 guarantees >= 2 grid steps
    whenever B >= 2 so the "parallel" axis can shard over v7x's two TensorCores.
    """
    if B <= 1:
        return 1
    return min(cap, (B + 1) // 2)


def block_forward(x, params, batch_tile=None, matmul_dtype=jnp.bfloat16):
    (ln1_w, ln1_b, wq, wk, wv, wproj, bproj,
     ln2_w, ln2_b, w1, b1, w2, b2) = params
    B, T, C = x.shape
    assert C == N_EMBD and T <= BLOCK_SIZE

    # Pad T to a multiple of 8 (sublane rule) and B to a multiple of the batch
    # tile; padded rows are finite garbage, sliced off below.  Causality means
    # padded (future) key positions never affect real-token outputs.
    Tp = -(-T // 8) * 8
    bb = batch_tile if batch_tile is not None else _pick_batch_tile(B)
    Bp = -(-B // bb) * bb
    if (Bp, Tp) != (B, T):
        x = jnp.pad(x, ((0, Bp - B), (0, Tp - T), (0, 0)))
    m_tile = bb * Tp

    # Fused QKV weight with 1/sqrt(d) folded into Wq; matmul weights cast once.
    scale = HEAD_SIZE ** -0.5
    wqkv = jnp.concatenate([wq * scale, wk, wv], axis=1).astype(matmul_dtype)
    wproj_c = wproj.astype(matmul_dtype)
    w1_c = w1.astype(matmul_dtype)
    w2_c = w2.astype(matmul_dtype)

    # Resident additive causal mask (finite large-negative; avoids inf - inf).
    tril = jnp.tril(jnp.ones((Tp, Tp), bool))
    mask2d = jnp.where(tril, 0.0, NEG_BIG).astype(jnp.float32)

    x2 = x.reshape(Bp * Tp, C)                        # token-packed slab

    kern = functools.partial(block_kernel, bb=bb, seq_len=Tp)
    full = lambda shape: pl.BlockSpec(shape, lambda i: (0, 0))
    resident_specs = [
        full((Tp, Tp)),                               # causal mask
        full((1, C)), full((1, C)),                   # ln1 w, b
        full((C, 3 * C)),                             # fused Wqkv (scaled q)
        full((C, C)), full((1, C)),                   # Wproj, bproj
        full((1, C)), full((1, C)),                   # ln2 w, b
        full((C, HIDDEN)), full((1, HIDDEN)),         # W1, b1
        full((HIDDEN, C)), full((1, C)),              # W2, b2
    ]

    out2 = pl.pallas_call(
        kern,
        out_shape=jax.ShapeDtypeStruct((Bp * Tp, C), x.dtype),
        grid_spec=pltpu.PrefetchScalarGridSpec(
            num_scalar_prefetch=0,
            grid=(Bp // bb,),
            in_specs=[pl.BlockSpec((m_tile, C), lambda i: (i, 0))] + resident_specs,
            out_specs=pl.BlockSpec((m_tile, C), lambda i: (i, 0)),
        ),
        compiler_params=pltpu.CompilerParams(
            dimension_semantics=("parallel",),
            vmem_limit_bytes=48 * 1024 * 1024),
    )(x2, mask2d, ln1_w, ln1_b, wqkv, wproj_c, bproj,
      ln2_w, ln2_b, w1_c, b1, w2_c, b2)
    return out2.reshape(Bp, Tp, C)[:B, :T]


def init_params(key):
    ks = jax.random.split(key, 8)
    std = 0.02
    ln1_w = jnp.ones((1, N_EMBD), jnp.float32)
    ln1_b = jnp.zeros((1, N_EMBD), jnp.float32)
    wq = std * jax.random.normal(ks[0], (N_EMBD, N_EMBD), jnp.float32)
    wk = std * jax.random.normal(ks[1], (N_EMBD, N_EMBD), jnp.float32)
    wv = std * jax.random.normal(ks[2], (N_EMBD, N_EMBD), jnp.float32)
    wproj = std * jax.random.normal(ks[3], (N_EMBD, N_EMBD), jnp.float32)
    bproj = std * jax.random.normal(ks[4], (1, N_EMBD), jnp.float32)
    ln2_w = jnp.ones((1, N_EMBD), jnp.float32)
    ln2_b = jnp.zeros((1, N_EMBD), jnp.float32)
    w1 = std * jax.random.normal(ks[5], (N_EMBD, HIDDEN), jnp.float32)
    b1 = jnp.zeros((1, HIDDEN), jnp.float32)
    w2 = std * jax.random.normal(ks[6], (HIDDEN, N_EMBD), jnp.float32)
    b2 = jnp.zeros((1, N_EMBD), jnp.float32)
    return (ln1_w, ln1_b, wq, wk, wv, wproj, bproj,
            ln2_w, ln2_b, w1, b1, w2, b2)


def reference_forward(x, params):
    (ln1_w, ln1_b, wq, wk, wv, wproj, bproj,
     ln2_w, ln2_b, w1, b1, w2, b2) = params
    B, T, _ = x.shape
    xn = _layer_norm(x, ln1_w[0], ln1_b[0])
    q, k, v = xn @ wq, xn @ wk, xn @ wv
    qh = q.reshape(B, T, N_HEAD, HEAD_SIZE).transpose(0, 2, 1, 3)
    kh = k.reshape(B, T, N_HEAD, HEAD_SIZE).transpose(0, 2, 1, 3)
    vh = v.reshape(B, T, N_HEAD, HEAD_SIZE).transpose(0, 2, 1, 3)
    wei = jnp.einsum('bhqd,bhkd->bhqk', qh, kh) * HEAD_SIZE ** -0.5
    mask = jnp.tril(jnp.ones((T, T), bool))
    wei = jnp.where(mask, wei, -jnp.inf)
    p = jax.nn.softmax(wei, axis=-1)
    o = jnp.einsum('bhqk,bhkd->bhqd', p, vh).transpose(0, 2, 1, 3)
    o = o.reshape(B, T, N_EMBD)
    x = x + (o @ wproj + bproj[0])
    xn2 = _layer_norm(x, ln2_w[0], ln2_b[0])
    ff = jnp.maximum(xn2 @ w1 + b1[0], 0.0) @ w2 + b2[0]
    return x + ff


if __name__ == "__main__":
    key = jax.random.PRNGKey(0)
    kx, kp = jax.random.split(key)
    B, T = 2, 8                      # T <= block_size (32)
    x = jax.random.normal(kx, (B, T, N_EMBD), jnp.float32)
    params = init_params(kp)

    ref = reference_forward(x, params)

    # f32-operand path: tight algorithmic check.
    out_f32 = jax.block_until_ready(
        block_forward(x, params, matmul_dtype=jnp.float32))
    assert out_f32.shape == (B, T, N_EMBD)
    assert jnp.allclose(out_f32, ref, rtol=1e-3, atol=1e-3), float(
        jnp.max(jnp.abs(out_f32 - ref)))

    # bf16-operand fast path (MXU bf16 rate); tolerance widened for bf16 rounding.
    out = jax.block_until_ready(block_forward(x, params))
    assert out.shape == (B, T, N_EMBD)
    assert jnp.allclose(out, ref, rtol=5e-3, atol=5e-3), float(
        jnp.max(jnp.abs(out - ref)))

    print("KERNEL_OK")
</pallas_src>

<mosaic_0001>
module attributes {stable_mosaic.version = 11 : i64} {
  func.func @block_kernel(%arg0: i32, %arg1: memref<8x64xf32, #tpu.memory_space<vmem>>, %arg2: memref<8x8xf32, #tpu.memory_space<vmem>>, %arg3: memref<1x64xf32, #tpu.memory_space<vmem>>, %arg4: memref<1x64xf32, #tpu.memory_space<vmem>>, %arg5: memref<64x192xf32, #tpu.memory_space<vmem>>, %arg6: memref<64x64xf32, #tpu.memory_space<vmem>>, %arg7: memref<1x64xf32, #tpu.memory_space<vmem>>, %arg8: memref<1x64xf32, #tpu.memory_space<vmem>>, %arg9: memref<1x64xf32, #tpu.memory_space<vmem>>, %arg10: memref<64x256xf32, #tpu.memory_space<vmem>>, %arg11: memref<1x256xf32, #tpu.memory_space<vmem>>, %arg12: memref<256x64xf32, #tpu.memory_space<vmem>>, %arg13: memref<1x64xf32, #tpu.memory_space<vmem>>, %arg14: memref<8x64xf32, #tpu.memory_space<vmem>>) attributes {dimension_semantics = [#tpu.dimension_semantics<parallel>], iteration_bounds = array<i64: 2>, scalar_prefetch = 0 : i64, scratch_operands = 0 : i64, tpu.core_type = #tpu.core_type<tc>, window_params = [{transform_indices = @transform_0, window_bounds = array<i64: 8, 64>}, {pipeline_mode = #tpu.pipeline_mode<synchronous>, transform_indices = @transform_1, window_bounds = array<i64: 8, 8>}, {pipeline_mode = #tpu.pipeline_mode<synchronous>, transform_indices = @transform_2, window_bounds = array<i64: 1, 64>}, {pipeline_mode = #tpu.pipeline_mode<synchronous>, transform_indices = @transform_3, window_bounds = array<i64: 1, 64>}, {pipeline_mode = #tpu.pipeline_mode<synchronous>, transform_indices = @transform_4, window_bounds = array<i64: 64, 192>}, {pipeline_mode = #tpu.pipeline_mode<synchronous>, transform_indices = @transform_5, window_bounds = array<i64: 64, 64>}, {pipeline_mode = #tpu.pipeline_mode<synchronous>, transform_indices = @transform_6, window_bounds = array<i64: 1, 64>}, {pipeline_mode = #tpu.pipeline_mode<synchronous>, transform_indices = @transform_7, window_bounds = array<i64: 1, 64>}, {pipeline_mode = #tpu.pipeline_mode<synchronous>, transform_indices = @transform_8, window_bounds = array<i64: 1, 64>}, {pipeline_mode = #tpu.pipeline_mode<synchronous>, transform_indices = @transform_9, window_bounds = array<i64: 64, 256>}, {pipeline_mode = #tpu.pipeline_mode<synchronous>, transform_indices = @transform_10, window_bounds = array<i64: 1, 256>}, {pipeline_mode = #tpu.pipeline_mode<synchronous>, transform_indices = @transform_11, window_bounds = array<i64: 256, 64>}, {pipeline_mode = #tpu.pipeline_mode<synchronous>, transform_indices = @transform_12, window_bounds = array<i64: 1, 64>}, {transform_indices = @transform_13, window_bounds = array<i64: 8, 64>}]} {
    %c0 = arith.constant 0 : index
    %c0_0 = arith.constant 0 : index
    %0 = vector.load %arg1[%c0, %c0_0] : memref<8x64xf32, #tpu.memory_space<vmem>>, vector<8x64xf32>
    %c0_1 = arith.constant 0 : index
    %c0_2 = arith.constant 0 : index
    %1 = vector.load %arg3[%c0_1, %c0_2] : memref<1x64xf32, #tpu.memory_space<vmem>>, vector<1x64xf32>
    %c0_3 = arith.constant 0 : index
    %c0_4 = arith.constant 0 : index
    %2 = vector.load %arg4[%c0_3, %c0_4] : memref<1x64xf32, #tpu.memory_space<vmem>>, vector<1x64xf32>
    %cst = arith.constant dense<0.000000e+00> : vector<8xf32>
    %3 = vector.multi_reduction <add>, %0, %cst [1] : vector<8x64xf32> to vector<8xf32>
    %4 = vector.shape_cast %3 : vector<8xf32> to vector<8x1xf32>
    %cst_5 = arith.constant 6.400000e+01 : f32
    %5 = vector.broadcast %cst_5 : f32 to vector<8x1xf32>
    %6 = arith.divf %4, %5 : vector<8x1xf32>
    %7 = arith.mulf %0, %0 : vector<8x64xf32>
    %cst_6 = arith.constant dense<0.000000e+00> : vector<8xf32>
    %8 = vector.multi_reduction <add>, %7, %cst_6 [1] : vector<8x64xf32> to vector<8xf32>
    %9 = vector.shape_cast %8 : vector<8xf32> to vector<8x1xf32>
    %cst_7 = arith.constant 6.400000e+01 : f32
    %10 = vector.broadcast %cst_7 : f32 to vector<8x1xf32>
    %11 = arith.divf %9, %10 : vector<8x1xf32>
    %12 = arith.mulf %6, %6 : vector<8x1xf32>
    %13 = arith.subf %11, %12 : vector<8x1xf32>
    %14 = vector.broadcast %6 : vector<8x1xf32> to vector<8x64xf32>
    %15 = arith.subf %0, %14 : vector<8x64xf32>
    %cst_8 = arith.constant 9.99999974E-6 : f32
    %16 = vector.broadcast %cst_8 : f32 to vector<8x1xf32>
    %17 = arith.addf %13, %16 : vector<8x1xf32>
    %18 = math.rsqrt %17 : vector<8x1xf32>
    %19 = vector.broadcast %18 : vector<8x1xf32> to vector<8x64xf32>
    %20 = arith.mulf %15, %19 : vector<8x64xf32>
    %21 = vector.broadcast %1 : vector<1x64xf32> to vector<8x64xf32>
    %22 = arith.mulf %20, %21 : vector<8x64xf32>
    %23 = vector.broadcast %2 : vector<1x64xf32> to vector<8x64xf32>
    %24 = arith.addf %22, %23 : vector<8x64xf32>
    %c0_9 = arith.constant 0 : index
    %c0_10 = arith.constant 0 : index
    %25 = vector.load %arg5[%c0_9, %c0_10] : memref<64x192xf32, #tpu.memory_space<vmem>>, vector<64x192xf32>
    %cst_11 = arith.constant dense<0.000000e+00> : vector<8x192xf32>
    %26 = tpu.matmul %24, %25, %cst_11 {dimension_numbers = #tpu.dot_dimension_numbers<[1], [0], [0], [1], [0, 0, 1, 1], [], []>} : vector<8x64xf32>, vector<64x192xf32>, vector<8x192xf32> -> vector<8x192xf32>
    %27 = vector.extract_strided_slice %26 {offsets = [0, 0], sizes = [8, 64], strides = [1, 1]} : vector<8x192xf32> to vector<8x64xf32>
    %28 = vector.shape_cast %27 : vector<8x64xf32> to vector<1x8x64xf32>
    %29 = vector.extract_strided_slice %26 {offsets = [0, 64], sizes = [8, 64], strides = [1, 1]} : vector<8x192xf32> to vector<8x64xf32>
    %30 = vector.shape_cast %29 : vector<8x64xf32> to vector<1x8x64xf32>
    %31 = vector.extract_strided_slice %26 {offsets = [0, 128], sizes = [8, 64], strides = [1, 1]} : vector<8x192xf32> to vector<8x64xf32>
    %32 = vector.shape_cast %31 : vector<8x64xf32> to vector<1x8x64xf32>
    %c0_12 = arith.constant 0 : index
    %c0_13 = arith.constant 0 : index
    %33 = vector.load %arg2[%c0_12, %c0_13] : memref<8x8xf32, #tpu.memory_space<vmem>>, vector<8x8xf32>
    %34 = vector.extract_strided_slice %28 {offsets = [0, 0, 0], sizes = [1, 8, 16], strides = [1, 1, 1]} : vector<1x8x64xf32> to vector<1x8x16xf32>
    %35 = vector.extract_strided_slice %30 {offsets = [0, 0, 0], sizes = [1, 8, 16], strides = [1, 1, 1]} : vector<1x8x64xf32> to vector<1x8x16xf32>
    %36 = vector.extract_strided_slice %32 {offsets = [0, 0, 0], sizes = [1, 8, 16], strides = [1, 1, 1]} : vector<1x8x64xf32> to vector<1x8x16xf32>
    "tpu.trace_start"() <{level = 10 : i32, message = "bqd,bkd->bqk"}> : () -> ()
    %cst_14 = arith.constant dense<0.000000e+00> : vector<1x8x8xf32>
    %37 = tpu.matmul %34, %35, %cst_14 {dimension_numbers = #tpu.dot_dimension_numbers<[2], [2], [1], [1], [0, 0, 0, 1, 1, 1], [0], [0]>} : vector<1x8x16xf32>, vector<1x8x16xf32>, vector<1x8x8xf32> -> vector<1x8x8xf32>
    "tpu.trace_stop"() : () -> ()
    %38 = vector.shape_cast %33 : vector<8x8xf32> to vector<1x8x8xf32>
    %39 = arith.addf %37, %38 : vector<1x8x8xf32>
    %cst_15 = arith.constant dense<0xFF800000> : vector<1x8xf32>
    %40 = vector.multi_reduction <maximumf>, %39, %cst_15 [2] : vector<1x8x8xf32> to vector<1x8xf32>
    %41 = vector.shape_cast %40 : vector<1x8xf32> to vector<1x8x1xf32>
    %42 = vector.broadcast %41 : vector<1x8x1xf32> to vector<1x8x8xf32>
    %43 = arith.subf %39, %42 : vector<1x8x8xf32>
    %44 = math.exp %43 : vector<1x8x8xf32>
    %cst_16 = arith.constant dense<0.000000e+00> : vector<1x8xf32>
    %45 = vector.multi_reduction <add>, %44, %cst_16 [2] : vector<1x8x8xf32> to vector<1x8xf32>
    %46 = vector.shape_cast %45 : vector<1x8xf32> to vector<1x8x1xf32>
    %47 = tpu.reciprocal %46 {approx = true} : vector<1x8x1xf32> -> vector<1x8x1xf32>
    %48 = vector.broadcast %47 : vector<1x8x1xf32> to vector<1x8x8xf32>
    %49 = arith.mulf %44, %48 : vector<1x8x8xf32>
    "tpu.trace_start"() <{level = 10 : i32, message = "bqk,bkd->bqd"}> : () -> ()
    %cst_17 = arith.constant dense<0.000000e+00> : vector<1x8x16xf32>
    %50 = tpu.matmul %49, %36, %cst_17 {dimension_numbers = #tpu.dot_dimension_numbers<[2], [1], [1], [2], [0, 0, 0, 1, 1, 2], [0], [0]>} : vector<1x8x8xf32>, vector<1x8x16xf32>, vector<1x8x16xf32> -> vector<1x8x16xf32>
    "tpu.trace_stop"() : () -> ()
    %51 = vector.extract_strided_slice %28 {offsets = [0, 0, 16], sizes = [1, 8, 16], strides = [1, 1, 1]} : vector<1x8x64xf32> to vector<1x8x16xf32>
    %52 = vector.extract_strided_slice %30 {offsets = [0, 0, 16], sizes = [1, 8, 16], strides = [1, 1, 1]} : vector<1x8x64xf32> to vector<1x8x16xf32>
    %53 = vector.extract_strided_slice %32 {offsets = [0, 0, 16], sizes = [1, 8, 16], strides = [1, 1, 1]} : vector<1x8x64xf32> to vector<1x8x16xf32>
    "tpu.trace_start"() <{level = 10 : i32, message = "bqd,bkd->bqk"}> : () -> ()
    %cst_18 = arith.constant dense<0.000000e+00> : vector<1x8x8xf32>
    %54 = tpu.matmul %51, %52, %cst_18 {dimension_numbers = #tpu.dot_dimension_numbers<[2], [2], [1], [1], [0, 0, 0, 1, 1, 1], [0], [0]>} : vector<1x8x16xf32>, vector<1x8x16xf32>, vector<1x8x8xf32> -> vector<1x8x8xf32>
    "tpu.trace_stop"() : () -> ()
    %55 = vector.shape_cast %33 : vector<8x8xf32> to vector<1x8x8xf32>
    %56 = arith.addf %54, %55 : vector<1x8x8xf32>
    %cst_19 = arith.constant dense<0xFF800000> : vector<1x8xf32>
    %57 = vector.multi_reduction <maximumf>, %56, %cst_19 [2] : vector<1x8x8xf32> to vector<1x8xf32>
    %58 = vector.shape_cast %57 : vector<1x8xf32> to vector<1x8x1xf32>
    %59 = vector.broadcast %58 : vector<1x8x1xf32> to vector<1x8x8xf32>
    %60 = arith.subf %56, %59 : vector<1x8x8xf32>
    %61 = math.exp %60 : vector<1x8x8xf32>
    %cst_20 = arith.constant dense<0.000000e+00> : vector<1x8xf32>
    %62 = vector.multi_reduction <add>, %61, %cst_20 [2] : vector<1x8x8xf32> to vector<1x8xf32>
    %63 = vector.shape_cast %62 : vector<1x8xf32> to vector<1x8x1xf32>
    %64 = tpu.reciprocal %63 {approx = true} : vector<1x8x1xf32> -> vector<1x8x1xf32>
    %65 = vector.broadcast %64 : vector<1x8x1xf32> to vector<1x8x8xf32>
    %66 = arith.mulf %61, %65 : vector<1x8x8xf32>
    "tpu.trace_start"() <{level = 10 : i32, message = "bqk,bkd->bqd"}> : () -> ()
    %cst_21 = arith.constant dense<0.000000e+00> : vector<1x8x16xf32>
    %67 = tpu.matmul %66, %53, %cst_21 {dimension_numbers = #tpu.dot_dimension_numbers<[2], [1], [1], [2], [0, 0, 0, 1, 1, 2], [0], [0]>} : vector<1x8x8xf32>, vector<1x8x16xf32>, vector<1x8x16xf32> -> vector<1x8x16xf32>
    "tpu.trace_stop"() : () -> ()
    %68 = vector.extract_strided_slice %28 {offsets = [0, 0, 32], sizes = [1, 8, 16], strides = [1, 1, 1]} : vector<1x8x64xf32> to vector<1x8x16xf32>
    %69 = vector.extract_strided_slice %30 {offsets = [0, 0, 32], sizes = [1, 8, 16], strides = [1, 1, 1]} : vector<1x8x64xf32> to vector<1x8x16xf32>
    %70 = vector.extract_strided_slice %32 {offsets = [0, 0, 32], sizes = [1, 8, 16], strides = [1, 1, 1]} : vector<1x8x64xf32> to vector<1x8x16xf32>
    "tpu.trace_start"() <{level = 10 : i32, message = "bqd,bkd->bqk"}> : () -> ()
    %cst_22 = arith.constant dense<0.000000e+00> : vector<1x8x8xf32>
    %71 = tpu.matmul %68, %69, %cst_22 {dimension_numbers = #tpu.dot_dimension_numbers<[2], [2], [1], [1], [0, 0, 0, 1, 1, 1], [0], [0]>} : vector<1x8x16xf32>, vector<1x8x16xf32>, vector<1x8x8xf32> -> vector<1x8x8xf32>
    "tpu.trace_stop"() : () -> ()
    %72 = vector.shape_cast %33 : vector<8x8xf32> to vector<1x8x8xf32>
    %73 = arith.addf %71, %72 : vector<1x8x8xf32>
    %cst_23 = arith.constant dense<0xFF800000> : vector<1x8xf32>
    %74 = vector.multi_reduction <maximumf>, %73, %cst_23 [2] : vector<1x8x8xf32> to vector<1x8xf32>
    %75 = vector.shape_cast %74 : vector<1x8xf32> to vector<1x8x1xf32>
    %76 = vector.broadcast %75 : vector<1x8x1xf32> to vector<1x8x8xf32>
    %77 = arith.subf %73, %76 : vector<1x8x8xf32>
    %78 = math.exp %77 : vector<1x8x8xf32>
    %cst_24 = arith.constant dense<0.000000e+00> : vector<1x8xf32>
    %79 = vector.multi_reduction <add>, %78, %cst_24 [2] : vector<1x8x8xf32> to vector<1x8xf32>
    %80 = vector.shape_cast %79 : vector<1x8xf32> to vector<1x8x1xf32>
    %81 = tpu.reciprocal %80 {approx = true} : vector<1x8x1xf32> -> vector<1x8x1xf32>
    %82 = vector.broadcast %81 : vector<1x8x1xf32> to vector<1x8x8xf32>
    %83 = arith.mulf %78, %82 : vector<1x8x8xf32>
    "tpu.trace_start"() <{level = 10 : i32, message = "bqk,bkd->bqd"}> : () -> ()
    %cst_25 = arith.constant dense<0.000000e+00> : vector<1x8x16xf32>
    %84 = tpu.matmul %83, %70, %cst_25 {dimension_numbers = #tpu.dot_dimension_numbers<[2], [1], [1], [2], [0, 0, 0, 1, 1, 2], [0], [0]>} : vector<1x8x8xf32>, vector<1x8x16xf32>, vector<1x8x16xf32> -> vector<1x8x16xf32>
    "tpu.trace_stop"() : () -> ()
    %85 = vector.extract_strided_slice %28 {offsets = [0, 0, 48], sizes = [1, 8, 16], strides = [1, 1, 1]} : vector<1x8x64xf32> to vector<1x8x16xf32>
    %86 = vector.extract_strided_slice %30 {offsets = [0, 0, 48], sizes = [1, 8, 16], strides = [1, 1, 1]} : vector<1x8x64xf32> to vector<1x8x16xf32>
    %87 = vector.extract_strided_slice %32 {offsets = [0, 0, 48], sizes = [1, 8, 16], strides = [1, 1, 1]} : vector<1x8x64xf32> to vector<1x8x16xf32>
    "tpu.trace_start"() <{level = 10 : i32, message = "bqd,bkd->bqk"}> : () -> ()
    %cst_26 = arith.constant dense<0.000000e+00> : vector<1x8x8xf32>
    %88 = tpu.matmul %85, %86, %cst_26 {dimension_numbers = #tpu.dot_dimension_numbers<[2], [2], [1], [1], [0, 0, 0, 1, 1, 1], [0], [0]>} : vector<1x8x16xf32>, vector<1x8x16xf32>, vector<1x8x8xf32> -> vector<1x8x8xf32>
    "tpu.trace_stop"() : () -> ()
    %89 = vector.shape_cast %33 : vector<8x8xf32> to vector<1x8x8xf32>
    %90 = arith.addf %88, %89 : vector<1x8x8xf32>
    %cst_27 = arith.constant dense<0xFF800000> : vector<1x8xf32>
    %91 = vector.multi_reduction <maximumf>, %90, %cst_27 [2] : vector<1x8x8xf32> to vector<1x8xf32>
    %92 = vector.shape_cast %91 : vector<1x8xf32> to vector<1x8x1xf32>
    %93 = vector.broadcast %92 : vector<1x8x1xf32> to vector<1x8x8xf32>
    %94 = arith.subf %90, %93 : vector<1x8x8xf32>
    %95 = math.exp %94 : vector<1x8x8xf32>
    %cst_28 = arith.constant dense<0.000000e+00> : vector<1x8xf32>
    %96 = vector.multi_reduction <add>, %95, %cst_28 [2] : vector<1x8x8xf32> to vector<1x8xf32>
    %97 = vector.shape_cast %96 : vector<1x8xf32> to vector<1x8x1xf32>
    %98 = tpu.reciprocal %97 {approx = true} : vector<1x8x1xf32> -> vector<1x8x1xf32>
    %99 = vector.broadcast %98 : vector<1x8x1xf32> to vector<1x8x8xf32>
    %100 = arith.mulf %95, %99 : vector<1x8x8xf32>
    "tpu.trace_start"() <{level = 10 : i32, message = "bqk,bkd->bqd"}> : () -> ()
    %cst_29 = arith.constant dense<0.000000e+00> : vector<1x8x16xf32>
    %101 = tpu.matmul %100, %87, %cst_29 {dimension_numbers = #tpu.dot_dimension_numbers<[2], [1], [1], [2], [0, 0, 0, 1, 1, 2], [0], [0]>} : vector<1x8x8xf32>, vector<1x8x16xf32>, vector<1x8x16xf32> -> vector<1x8x16xf32>
    "tpu.trace_stop"() : () -> ()
    %102 = tpu.concatenate %50, %67, %84, %101 in 2 : vector<1x8x16xf32>, vector<1x8x16xf32>, vector<1x8x16xf32>, vector<1x8x16xf32> -> vector<1x8x64xf32>
    %103 = vector.shape_cast %102 : vector<1x8x64xf32> to vector<8x64xf32>
    %c0_30 = arith.constant 0 : index
    %c0_31 = arith.constant 0 : index
    %104 = vector.load %arg6[%c0_30, %c0_31] : memref<64x64xf32, #tpu.memory_space<vmem>>, vector<64x64xf32>
    %cst_32 = arith.constant dense<0.000000e+00> : vector<8x64xf32>
    %105 = tpu.matmul %103, %104, %cst_32 {dimension_numbers = #tpu.dot_dimension_numbers<[1], [0], [0], [1], [0, 0, 1, 1], [], []>} : vector<8x64xf32>, vector<64x64xf32>, vector<8x64xf32> -> vector<8x64xf32>
    %c0_33 = arith.constant 0 : index
    %c0_34 = arith.constant 0 : index
    %106 = vector.load %arg7[%c0_33, %c0_34] : memref<1x64xf32, #tpu.memory_space<vmem>>, vector<1x64xf32>
    %107 = vector.broadcast %106 : vector<1x64xf32> to vector<8x64xf32>
    %108 = arith.addf %105, %107 : vector<8x64xf32>
    %109 = arith.addf %0, %108 : vector<8x64xf32>
    %c0_35 = arith.constant 0 : index
    %c0_36 = arith.constant 0 : index
    %110 = vector.load %arg8[%c0_35, %c0_36] : memref<1x64xf32, #tpu.memory_space<vmem>>, vector<1x64xf32>
    %c0_37 = arith.constant 0 : index
    %c0_38 = arith.constant 0 : index
    %111 = vector.load %arg9[%c0_37, %c0_38] : memref<1x64xf32, #tpu.memory_space<vmem>>, vector<1x64xf32>
    %cst_39 = arith.constant dense<0.000000e+00> : vector<8xf32>
    %112 = vector.multi_reduction <add>, %109, %cst_39 [1] : vector<8x64xf32> to vector<8xf32>
    %113 = vector.shape_cast %112 : vector<8xf32> to vector<8x1xf32>
    %cst_40 = arith.constant 6.400000e+01 : f32
    %114 = vector.broadcast %cst_40 : f32 to vector<8x1xf32>
    %115 = arith.divf %113, %114 : vector<8x1xf32>
    %116 = arith.mulf %109, %109 : vector<8x64xf32>
    %cst_41 = arith.constant dense<0.000000e+00> : vector<8xf32>
    %117 = vector.multi_reduction <add>, %116, %cst_41 [1] : vector<8x64xf32> to vector<8xf32>
    %118 = vector.shape_cast %117 : vector<8xf32> to vector<8x1xf32>
    %cst_42 = arith.constant 6.400000e+01 : f32
    %119 = vector.broadcast %cst_42 : f32 to vector<8x1xf32>
    %120 = arith.divf %118, %119 : vector<8x1xf32>
    %121 = arith.mulf %115, %115 : vector<8x1xf32>
    %122 = arith.subf %120, %121 : vector<8x1xf32>
    %123 = vector.broadcast %115 : vector<8x1xf32> to vector<8x64xf32>
    %124 = arith.subf %109, %123 : vector<8x64xf32>
    %cst_43 = arith.constant 9.99999974E-6 : f32
    %125 = vector.broadcast %cst_43 : f32 to vector<8x1xf32>
    %126 = arith.addf %122, %125 : vector<8x1xf32>
    %127 = math.rsqrt %126 : vector<8x1xf32>
    %128 = vector.broadcast %127 : vector<8x1xf32> to vector<8x64xf32>
    %129 = arith.mulf %124, %128 : vector<8x64xf32>
    %130 = vector.broadcast %110 : vector<1x64xf32> to vector<8x64xf32>
    %131 = arith.mulf %129, %130 : vector<8x64xf32>
    %132 = vector.broadcast %111 : vector<1x64xf32> to vector<8x64xf32>
    %133 = arith.addf %131, %132 : vector<8x64xf32>
    %c0_44 = arith.constant 0 : index
    %c0_45 = arith.constant 0 : index
    %134 = vector.load %arg10[%c0_44, %c0_45] : memref<64x256xf32, #tpu.memory_space<vmem>>, vector<64x256xf32>
    %cst_46 = arith.constant dense<0.000000e+00> : vector<8x256xf32>
    %135 = tpu.matmul %133, %134, %cst_46 {dimension_numbers = #tpu.dot_dimension_numbers<[1], [0], [0], [1], [0, 0, 1, 1], [], []>} : vector<8x64xf32>, vector<64x256xf32>, vector<8x256xf32> -> vector<8x256xf32>
    %c0_47 = arith.constant 0 : index
    %c0_48 = arith.constant 0 : index
    %136 = vector.load %arg11[%c0_47, %c0_48] : memref<1x256xf32, #tpu.memory_space<vmem>>, vector<1x256xf32>
    %137 = vector.broadcast %136 : vector<1x256xf32> to vector<8x256xf32>
    %138 = arith.addf %135, %137 : vector<8x256xf32>
    %cst_49 = arith.constant 0.000000e+00 : f32
    %139 = vector.broadcast %cst_49 : f32 to vector<8x256xf32>
    %140 = arith.maximumf %138, %139 : vector<8x256xf32>
    %c0_50 = arith.constant 0 : index
    %c0_51 = arith.constant 0 : index
    %141 = vector.load %arg12[%c0_50, %c0_51] : memref<256x64xf32, #tpu.memory_space<vmem>>, vector<256x64xf32>
    %cst_52 = arith.constant dense<0.000000e+00> : vector<8x64xf32>
    %142 = tpu.matmul %140, %141, %cst_52 {dimension_numbers = #tpu.dot_dimension_numbers<[1], [0], [0], [1], [0, 0, 1, 1], [], []>} : vector<8x256xf32>, vector<256x64xf32>, vector<8x64xf32> -> vector<8x64xf32>
    %c0_53 = arith.constant 0 : index
    %c0_54 = arith.constant 0 : index
    %143 = vector.load %arg13[%c0_53, %c0_54] : memref<1x64xf32, #tpu.memory_space<vmem>>, vector<1x64xf32>
    %144 = vector.broadcast %143 : vector<1x64xf32> to vector<8x64xf32>
    %145 = arith.addf %142, %144 : vector<8x64xf32>
    %146 = arith.addf %109, %145 : vector<8x64xf32>
    %c0_55 = arith.constant 0 : index
    %c0_56 = arith.constant 0 : index
    %147 = vector.load %arg14[%c0_55, %c0_56] : memref<8x64xf32, #tpu.memory_space<vmem>>, vector<8x64xf32>
    tpu.vector_store %arg14[%c0_55, %c0_56], %146 {strides = array<i32>} : memref<8x64xf32, #tpu.memory_space<vmem>>, vector<8x64xf32>,
    return
  }
  func.func @transform_0(%arg0: i32) -> (i32, i32) {
    %c0_i32 = arith.constant 0 : i32
    %c0_i32_0 = arith.constant 0 : i32
    return %arg0, %c0_i32 : i32, i32
  }
  func.func @transform_1(%arg0: i32) -> (i32, i32) {
    %c0_i32 = arith.constant 0 : i32
    %c0_i32_0 = arith.constant 0 : i32
    %c0_i32_1 = arith.constant 0 : i32
    return %c0_i32, %c0_i32_0 : i32, i32
  }
  func.func @transform_2(%arg0: i32) -> (i32, i32) {
    %c0_i32 = arith.constant 0 : i32
    %c0_i32_0 = arith.constant 0 : i32
    %c0_i32_1 = arith.constant 0 : i32
    return %c0_i32, %c0_i32_0 : i32, i32
  }
  func.func @transform_3(%arg0: i32) -> (i32, i32) {
    %c0_i32 = arith.constant 0 : i32
    %c0_i32_0 = arith.constant 0 : i32
    %c0_i32_1 = arith.constant 0 : i32
    return %c0_i32, %c0_i32_0 : i32, i32
  }
  func.func @transform_4(%arg0: i32) -> (i32, i32) {
    %c0_i32 = arith.constant 0 : i32
    %c0_i32_0 = arith.constant 0 : i32
    %c0_i32_1 = arith.constant 0 : i32
    return %c0_i32, %c0_i32_0 : i32, i32
  }
  func.func @transform_5(%arg0: i32) -> (i32, i32) {
    %c0_i32 = arith.constant 0 : i32
    %c0_i32_0 = arith.constant 0 : i32
    %c0_i32_1 = arith.constant 0 : i32
    return %c0_i32, %c0_i32_0 : i32, i32
  }
  func.func @transform_6(%arg0: i32) -> (i32, i32) {
    %c0_i32 = arith.constant 0 : i32
    %c0_i32_0 = arith.constant 0 : i32
    %c0_i32_1 = arith.constant 0 : i32
    return %c0_i32, %c0_i32_0 : i32, i32
  }
  func.func @transform_7(%arg0: i32) -> (i32, i32) {
    %c0_i32 = arith.constant 0 : i32
    %c0_i32_0 = arith.constant 0 : i32
    %c0_i32_1 = arith.constant 0 : i32
    return %c0_i32, %c0_i32_0 : i32, i32
  }
  func.func @transform_8(%arg0: i32) -> (i32, i32) {
    %c0_i32 = arith.constant 0 : i32
    %c0_i32_0 = arith.constant 0 : i32
    %c0_i32_1 = arith.constant 0 : i32
    return %c0_i32, %c0_i32_0 : i32, i32
  }
  func.func @transform_9(%arg0: i32) -> (i32, i32) {
    %c0_i32 = arith.constant 0 : i32
    %c0_i32_0 = arith.constant 0 : i32
    %c0_i32_1 = arith.constant 0 : i32
    return %c0_i32, %c0_i32_0 : i32, i32
  }
  func.func @transform_10(%arg0: i32) -> (i32, i32) {
    %c0_i32 = arith.constant 0 : i32
    %c0_i32_0 = arith.constant 0 : i32
    %c0_i32_1 = arith.constant 0 : i32
    return %c0_i32, %c0_i32_0 : i32, i32
  }
  func.func @transform_11(%arg0: i32) -> (i32, i32) {
    %c0_i32 = arith.constant 0 : i32
    %c0_i32_0 = arith.constant 0 : i32
    %c0_i32_1 = arith.constant 0 : i32
    return %c0_i32, %c0_i32_0 : i32, i32
  }
  func.func @transform_12(%arg0: i32) -> (i32, i32) {
    %c0_i32 = arith.constant 0 : i32
    %c0_i32_0 = arith.constant 0 : i32
    %c0_i32_1 = arith.constant 0 : i32
    return %c0_i32, %c0_i32_0 : i32, i32
  }
  func.func @transform_13(%arg0: i32) -> (i32, i32) {
    %c0_i32 = arith.constant 0 : i32
    %c0_i32_0 = arith.constant 0 : i32
    return %arg0, %c0_i32 : i32, i32
  }
}

</mosaic_0001>

<llo_original>
// kernel: tpu_custom_call.1
$region0: #{tpu_custom_call.1}
  #allocation0 [shape = 'u32[]', space=smem, size = 0x4, offset = 0x4, fixed_abs, tag = 'smem constant byte address 0x4 - core index']
  #allocation1 [shape = 'u32[144,128]{1,0:T(1,128)}', space=vmem, size = 0x12000, scoped, tag = 'internal scratch']
  %s0 = inlined_call_operand.vmem [shape: f32[16,64], index: 0, kind: input, shape index: {}]
  %s1 = inlined_call_operand.vmem [shape: f32[8,8], index: 1, kind: input, shape index: {}]
  %s2 = inlined_call_operand.vmem [shape: f32[1,64], index: 2, kind: input, shape index: {}]
  %s3 = inlined_call_operand.vmem [shape: f32[1,64], index: 3, kind: input, shape index: {}]
  %s4 = inlined_call_operand.vmem [shape: f32[64,192], index: 4, kind: input, shape index: {}]
  %s5 = inlined_call_operand.vmem [shape: f32[64,64], index: 5, kind: input, shape index: {}]
  %s6 = inlined_call_operand.vmem [shape: f32[1,64], index: 6, kind: input, shape index: {}]
  %s7 = inlined_call_operand.vmem [shape: f32[1,64], index: 7, kind: input, shape index: {}]
  %s8 = inlined_call_operand.vmem [shape: f32[1,64], index: 8, kind: input, shape index: {}]
  %s9 = inlined_call_operand.vmem [shape: f32[64,256], index: 9, kind: input, shape index: {}]
  %s10 = inlined_call_operand.vmem [shape: f32[1,256], index: 10, kind: input, shape index: {}]
  %s11 = inlined_call_operand.vmem [shape: f32[256,64], index: 11, kind: input, shape index: {}]
  %s12 = inlined_call_operand.vmem [shape: f32[1,64], index: 12, kind: input, shape index: {}]
  %s13 = inlined_call_operand.hbm [shape: f32[16,64], index: 13, kind: output, shape index: {}]
  %s14 = sld [smem:[#allocation0]]
  $region85: #{tpu_custom_call.1} parent=0
    _
  %s16 = ssub.s32 1, %s14
  %s17 = scalar_select 0, %s16, %s14
  $region1: #{tpu_custom_call.1} parent=0
    #allocation2 [shape = 'u8[8192]{0}', space=vmem, size = 0x2000, scoped, tag = 'output window, operand 0']
    #allocation3 [shape = 's32[2]{0}', space=sflag, size = 0x8, scoped, tag = 'scoped memory for tpu_custom_call.1']
    %18 = vsyncpa [#allocation3], 0
    %s19 = scalar_lea.sflag [#allocation3], 1
    %20 = vsyncpa %s19, 0
    loop: start=0, step=1, limit=4
    $region2: #{tpu_custom_call.1} parent=1 // loop_pre_header
      _
    $region3: #{tpu_custom_call.1} parent=1 // loop_header
      %s22 = sphi 0, %s26
      %p23 = scmp.ge.s32.totalorder %s22, 4
      %s32 = sphi 0, %s34
      %s35 = sphi 0, %s32
      %s36 = sphi 0, %s35
      %s52 = sphi 0, %s36
      %s56 = sphi 0, %s56
      %s58 = sphi 0, %s56
      %s59 = sphi 0, %s58
      %s73 = sphi 0, %s59
      %s77 = sphi 0, %s77
      %s79 = sphi 0, %s77
      %s80 = sphi 0, %s79
      %s94 = sphi 0, %s80
      %s98 = sphi 0, %s98
      %s100 = sphi 0, %s98
      %s101 = sphi 0, %s100
      %s115 = sphi 0, %s101
      %s119 = sphi 0, %s119
      %s121 = sphi 0, %s119
      %s122 = sphi 0, %s121
      %s136 = sphi 0, %s122
      %s140 = sphi 0, %s140
      %s142 = sphi 0, %s140
      %s143 = sphi 0, %s142
      %s157 = sphi 0, %s143
      %s161 = sphi 0, %s161
      %s163 = sphi 0, %s161
      %s164 = sphi 0, %s163
      %s178 = sphi 0, %s164
      %s182 = sphi 0, %s182
      %s184 = sphi 0, %s182
      %s185 = sphi 0, %s184
      %s199 = sphi 0, %s185
      %s203 = sphi 0, %s203
      %s205 = sphi 0, %s203
      %s206 = sphi 0, %s205
      %s220 = sphi 0, %s206
      %s224 = sphi 0, %s224
      %s226 = sphi 0, %s224
      %s227 = sphi 0, %s226
      %s241 = sphi 0, %s227
      %s245 = sphi 0, %s245
      %s247 = sphi 0, %s245
      %s248 = sphi 0, %s247
      %s262 = sphi 0, %s248
      %s266 = sphi 0, %s266
      %s268 = sphi 0, %s266
      %s269 = sphi 0, %s268
      %s283 = sphi 0, %s269
      %s287 = sphi 0, %s287
      %s289 = sphi 0, %s287
      %s290 = sphi 0, %s289
      %s304 = sphi 0, %s290
      %s310 = sphi 0, %s312
      %s313 = sphi 0, %s310
      %s314 = sphi 0, %s313
      %s330 = sphi 0, %s314
    $region4: #{tpu_custom_call.1} parent=1 // loop_header_branch
      %25 = sbr.rel (%p23) target = $region8
    $region5: #{tpu_custom_call.1} parent=1 // loop_body
      %s27 = ssub.s32 %s22, 1
      %s28 = ssub.s32 %s22, 2
      %s29 = sadd.s32 %s22, 1
      %s30 = ssub.s32 %s22, %s29
      %p31 = scmp.eq.s32.totalorder %s30, 0
      %s33 = sadd.s32 %s32, 1
      %s34 = scalar_select %p31, %s32, %s33
      %p37 = pneg %p31
      %p38 = scmp.eq.s32.totalorder %s22, 1
      %p39 = por %p37, %p38
      %p40 = scmp.ne.s32.totalorder %s32, %s35
      %p41 = scmp.eq.s32.totalorder %s22, 0
      %p42 = por %p40, %p41
      %p43 = scmp.ne.s32.totalorder %s32, %s35
      %p44 = scmp.eq.s32.totalorder %s27, 1
      %p45 = por %p43, %p44
      %p46 = scmp.ne.s32.totalorder %s35, %s36
      %p47 = scmp.eq.s32.totalorder %s27, 0
      %p48 = por %p46, %p47
      %p49 = scmp.ne.s32.totalorder %s35, %s36
      %p50 = scmp.eq.s32.totalorder %s28, 1
      %p51 = por %p49, %p50
      %p53 = scmp.ne.s32.totalorder %s36, %s52
      %p54 = scmp.eq.s32.totalorder %s28, 0
      %p55 = por %p53, %p54
      %s57 = sadd.s32 %s56, 1
      %p60 = scmp.eq.s32.totalorder %s22, 1
      %p61 = scmp.ne.s32.totalorder %s56, %s58
      %p62 = scmp.eq.s32.totalorder %s22, 0
      %p63 = por %p61, %p62
      %p64 = scmp.ne.s32.totalorder %s56, %s58
      %p65 = scmp.eq.s32.totalorder %s27, 1
      %p66 = por %p64, %p65
      %p67 = scmp.ne.s32.totalorder %s58, %s59
      %p68 = scmp.eq.s32.totalorder %s27, 0
      %p69 = por %p67, %p68
      %p70 = scmp.ne.s32.totalorder %s58, %s59
      %p71 = scmp.eq.s32.totalorder %s28, 1
      %p72 = por %p70, %p71
      %p74 = scmp.ne.s32.totalorder %s59, %s73
      %p75 = scmp.eq.s32.totalorder %s28, 0
      %p76 = por %p74, %p75
      %s78 = sadd.s32 %s77, 1
      %p81 = scmp.eq.s32.totalorder %s22, 1
      %p82 = scmp.ne.s32.totalorder %s77, %s79
      %p83 = scmp.eq.s32.totalorder %s22, 0
      %p84 = por %p82, %p83
      %p85 = scmp.ne.s32.totalorder %s77, %s79
      %p86 = scmp.eq.s32.totalorder %s27, 1
      %p87 = por %p85, %p86
      %p88 = scmp.ne.s32.totalorder %s79, %s80
      %p89 = scmp.eq.s32.totalorder %s27, 0
      %p90 = por %p88, %p89
      %p91 = scmp.ne.s32.totalorder %s79, %s80
      %p92 = scmp.eq.s32.totalorder %s28, 1
      %p93 = por %p91, %p92
      %p95 = scmp.ne.s32.totalorder %s80, %s94
      %p96 = scmp.eq.s32.totalorder %s28, 0
      %p97 = por %p95, %p96
      %s99 = sadd.s32 %s98, 1
      %p102 = scmp.eq.s32.totalorder %s22, 1
      %p103 = scmp.ne.s32.totalorder %s98, %s100
      %p104 = scmp.eq.s32.totalorder %s22, 0
      %p105 = por %p103, %p104
      %p106 = scmp.ne.s32.totalorder %s98, %s100
      %p107 = scmp.eq.s32.totalorder %s27, 1
      %p108 = por %p106, %p107
      %p109 = scmp.ne.s32.totalorder %s100, %s101
      %p110 = scmp.eq.s32.totalorder %s27, 0
      %p111 = por %p109, %p110
      %p112 = scmp.ne.s32.totalorder %s100, %s101
      %p113 = scmp.eq.s32.totalorder %s28, 1
      %p114 = por %p112, %p113
      %p116 = scmp.ne.s32.totalorder %s101, %s115
      %p117 = scmp.eq.s32.totalorder %s28, 0
      %p118 = por %p116, %p117
      %s120 = sadd.s32 %s119, 1
      %p123 = scmp.eq.s32.totalorder %s22, 1
      %p124 = scmp.ne.s32.totalorder %s119, %s121
      %p125 = scmp.eq.s32.totalorder %s22, 0
      %p126 = por %p124, %p125
      %p127 = scmp.ne.s32.totalorder %s119, %s121
      %p128 = scmp.eq.s32.totalorder %s27, 1
      %p129 = por %p127, %p128
      %p130 = scmp.ne.s32.totalorder %s121, %s122
      %p131 = scmp.eq.s32.totalorder %s27, 0
      %p132 = por %p130, %p131
      %p133 = scmp.ne.s32.totalorder %s121, %s122
      %p134 = scmp.eq.s32.totalorder %s28, 1
      %p135 = por %p133, %p134
      %p137 = scmp.ne.s32.totalorder %s122, %s136
      %p138 = scmp.eq.s32.totalorder %s28, 0
      %p139 = por %p137, %p138
      %s141 = sadd.s32 %s140, 1
      %p144 = scmp.eq.s32.totalorder %s22, 1
      %p145 = scmp.ne.s32.totalorder %s140, %s142
      %p146 = scmp.eq.s32.totalorder %s22, 0
      %p147 = por %p145, %p146
      %p148 = scmp.ne.s32.totalorder %s140, %s142
      %p149 = scmp.eq.s32.totalorder %s27, 1
      %p150 = por %p148, %p149
      %p151 = scmp.ne.s32.totalorder %s142, %s143
      %p152 = scmp.eq.s32.totalorder %s27, 0
      %p153 = por %p151, %p152
      %p154 = scmp.ne.s32.totalorder %s142, %s143
      %p155 = scmp.eq.s32.totalorder %s28, 1
      %p156 = por %p154, %p155
      %p158 = scmp.ne.s32.totalorder %s143, %s157
      %p159 = scmp.eq.s32.totalorder %s28, 0
      %p160 = por %p158, %p159
      %s162 = sadd.s32 %s161, 1
      %p165 = scmp.eq.s32.totalorder %s22, 1
      %p166 = scmp.ne.s32.totalorder %s161, %s163
      %p167 = scmp.eq.s32.totalorder %s22, 0
      %p168 = por %p166, %p167
      %p169 = scmp.ne.s32.totalorder %s161, %s163
      %p170 = scmp.eq.s32.totalorder %s27, 1
      %p171 = por %p169, %p170
      %p172 = scmp.ne.s32.totalorder %s163, %s164
      %p173 = scmp.eq.s32.totalorder %s27, 0
      %p174 = por %p172, %p173
      %p175 = scmp.ne.s32.totalorder %s163, %s164
      %p176 = scmp.eq.s32.totalorder %s28, 1
      %p177 = por %p175, %p176
      %p179 = scmp.ne.s32.totalorder %s164, %s178
      %p180 = scmp.eq.s32.totalorder %s28, 0
      %p181 = por %p179, %p180
      %s183 = sadd.s32 %s182, 1
      %p186 = scmp.eq.s32.totalorder %s22, 1
      %p187 = scmp.ne.s32.totalorder %s182, %s184
      %p188 = scmp.eq.s32.totalorder %s22, 0
      %p189 = por %p187, %p188
      %p190 = scmp.ne.s32.totalorder %s182, %s184
      %p191 = scmp.eq.s32.totalorder %s27, 1
      %p192 = por %p190, %p191
      %p193 = scmp.ne.s32.totalorder %s184, %s185
      %p194 = scmp.eq.s32.totalorder %s27, 0
      %p195 = por %p193, %p194
      %p196 = scmp.ne.s32.totalorder %s184, %s185
      %p197 = scmp.eq.s32.totalorder %s28, 1
      %p198 = por %p196, %p197
      %p200 = scmp.ne.s32.totalorder %s185, %s199
      %p201 = scmp.eq.s32.totalorder %s28, 0
      %p202 = por %p200, %p201
      %s204 = sadd.s32 %s203, 1
      %p207 = scmp.eq.s32.totalorder %s22, 1
      %p208 = scmp.ne.s32.totalorder %s203, %s205
      %p209 = scmp.eq.s32.totalorder %s22, 0
      %p210 = por %p208, %p209
      %p211 = scmp.ne.s32.totalorder %s203, %s205
      %p212 = scmp.eq.s32.totalorder %s27, 1
      %p213 = por %p211, %p212
      %p214 = scmp.ne.s32.totalorder %s205, %s206
      %p215 = scmp.eq.s32.totalorder %s27, 0
      %p216 = por %p214, %p215
      %p217 = scmp.ne.s32.totalorder %s205, %s206
      %p218 = scmp.eq.s32.totalorder %s28, 1
      %p219 = por %p217, %p218
      %p221 = scmp.ne.s32.totalorder %s206, %s220
      %p222 = scmp.eq.s32.totalorder %s28, 0
      %p223 = por %p221, %p222
      %s225 = sadd.s32 %s224, 1
      %p228 = scmp.eq.s32.totalorder %s22, 1
      %p229 = scmp.ne.s32.totalorder %s224, %s226
      %p230 = scmp.eq.s32.totalorder %s22, 0
      %p231 = por %p229, %p230
      %p232 = scmp.ne.s32.totalorder %s224, %s226
      %p233 = scmp.eq.s32.totalorder %s27, 1
      %p234 = por %p232, %p233
      %p235 = scmp.ne.s32.totalorder %s226, %s227
      %p236 = scmp.eq.s32.totalorder %s27, 0
      %p237 = por %p235, %p236
      %p238 = scmp.ne.s32.totalorder %s226, %s227
      %p239 = scmp.eq.s32.totalorder %s28, 1
      %p240 = por %p238, %p239
      %p242 = scmp.ne.s32.totalorder %s227, %s241
      %p243 = scmp.eq.s32.totalorder %s28, 0
      %p244 = por %p242, %p243
      %s246 = sadd.s32 %s245, 1
      %p249 = scmp.eq.s32.totalorder %s22, 1
      %p250 = scmp.ne.s32.totalorder %s245, %s247
      %p251 = scmp.eq.s32.totalorder %s22, 0
      %p252 = por %p250, %p251
      %p253 = scmp.ne.s32.totalorder %s245, %s247
      %p254 = scmp.eq.s32.totalorder %s27, 1
      %p255 = por %p253, %p254
      %p256 = scmp.ne.s32.totalorder %s247, %s248
      %p257 = scmp.eq.s32.totalorder %s27, 0
      %p258 = por %p256, %p257
      %p259 = scmp.ne.s32.totalorder %s247, %s248
      %p260 = scmp.eq.s32.totalorder %s28, 1
      %p261 = por %p259, %p260
      %p263 = scmp.ne.s32.totalorder %s248, %s262
      %p264 = scmp.eq.s32.totalorder %s28, 0
      %p265 = por %p263, %p264
      %s267 = sadd.s32 %s266, 1
      %p270 = scmp.eq.s32.totalorder %s22, 1
      %p271 = scmp.ne.s32.totalorder %s266, %s268
      %p272 = scmp.eq.s32.totalorder %s22, 0
      %p273 = por %p271, %p272
      %p274 = scmp.ne.s32.totalorder %s266, %s268
      %p275 = scmp.eq.s32.totalorder %s27, 1
      %p276 = por %p274, %p275
      %p277 = scmp.ne.s32.totalorder %s268, %s269
      %p278 = scmp.eq.s32.totalorder %s27, 0
      %p279 = por %p277, %p278
      %p280 = scmp.ne.s32.totalorder %s268, %s269
      %p281 = scmp.eq.s32.totalorder %s28, 1
      %p282 = por %p280, %p281
      %p284 = scmp.ne.s32.totalorder %s269, %s283
      %p285 = scmp.eq.s32.totalorder %s28, 0
      %p286 = por %p284, %p285
      %s288 = sadd.s32 %s287, 1
      %p291 = scmp.eq.s32.totalorder %s22, 1
      %p292 = scmp.ne.s32.totalorder %s287, %s289
      %p293 = scmp.eq.s32.totalorder %s22, 0
      %p294 = por %p292, %p293
      %p295 = scmp.ne.s32.totalorder %s287, %s289
      %p296 = scmp.eq.s32.totalorder %s27, 1
      %p297 = por %p295, %p296
      %p298 = scmp.ne.s32.totalorder %s289, %s290
      %p299 = scmp.eq.s32.totalorder %s27, 0
      %p300 = por %p298, %p299
      %p301 = scmp.ne.s32.totalorder %s289, %s290
      %p302 = scmp.eq.s32.totalorder %s28, 1
      %p303 = por %p301, %p302
      %p305 = scmp.ne.s32.totalorder %s290, %s304
      %p306 = scmp.eq.s32.totalorder %s28, 0
      %p307 = por %p305, %p306
      %s308 = ssub.s32 %s22, %s29
      %p309 = scmp.eq.s32.totalorder %s308, 0
      %s311 = sadd.s32 %s310, 1
      %s312 = scalar_select %p309, %s310, %s311
      %p315 = pneg %p309
      %p316 = scmp.eq.s32.totalorder %s22, 1
      %p317 = por %p315, %p316
      %p318 = scmp.ne.s32.totalorder %s310, %s313
      %p319 = scmp.eq.s32.totalorder %s22, 0
      %p320 = por %p318, %p319
      %p321 = scmp.ne.s32.totalorder %s310, %s313
      %p322 = scmp.eq.s32.totalorder %s27, 1
      %p323 = por %p321, %p322
      %p324 = scmp.ne.s32.totalorder %s313, %s314
      %p325 = scmp.eq.s32.totalorder %s27, 0
      %p326 = por %p324, %p325
      %p327 = scmp.ne.s32.totalorder %s313, %s314
      %p328 = scmp.eq.s32.totalorder %s28, 1
      %p329 = por %p327, %p328
      %p331 = scmp.ne.s32.totalorder %s314, %s330
      %p332 = scmp.eq.s32.totalorder %s28, 0
      %p333 = por %p331, %p332
      %p334 = scmp.le.s32.totalorder 1, %s22
      %p335 = scmp.lt.s32.totalorder %s22, 3
      %p336 = pnand %p334, %p335
      %p337 = pneg %p336
      // Predicated region
      $region9: #{tpu_custom_call.1} parent=5 // pred_check
        _
      $region10: #{tpu_custom_call.1} parent=5 // pred_check_branch
        %339 = sbr.rel (%p336) target = $region12
      $region11: #{tpu_custom_call.1} parent=5 // pred_region
        %s340 = ssub.s32 %s22, 1
        // Predicated region
        $region13: #{tpu_custom_call.1} parent=11 // pred_check
          %p341 = pneg %p69
        $region14: #{tpu_custom_call.1} parent=11 // pred_check_branch
          %343 = sbr.rel (%p341) target = $region16
        $region15: #{tpu_custom_call.1} parent=11 // pred_region
          _
        $region16: #{tpu_custom_call.1} parent=11 // pred_fallthru
          _
        // Predicated region
        $region17: #{tpu_custom_call.1} parent=11 // pred_check
          %p344 = pneg %p90
        $region18: #{tpu_custom_call.1} parent=11 // pred_check_branch
          %346 = sbr.rel (%p344) target = $region20
        $region19: #{tpu_custom_call.1} parent=11 // pred_region
          _
        $region20: #{tpu_custom_call.1} parent=11 // pred_fallthru
          _
        // Predicated region
        $region21: #{tpu_custom_call.1} parent=11 // pred_check
          %p347 = pneg %p111
        $region22: #{tpu_custom_call.1} parent=11 // pred_check_branch
          %349 = sbr.rel (%p347) target = $region24
        $region23: #{tpu_custom_call.1} parent=11 // pred_region
          _
        $region24: #{tpu_custom_call.1} parent=11 // pred_fallthru
          _
        // Predicated region
        $region25: #{tpu_custom_call.1} parent=11 // pred_check
          %p350 = pneg %p132
        $region26: #{tpu_custom_call.1} parent=11 // pred_check_branch
          %352 = sbr.rel (%p350) target = $region28
        $region27: #{tpu_custom_call.1} parent=11 // pred_region
          _
        $region28: #{tpu_custom_call.1} parent=11 // pred_fallthru
          _
        // Predicated region
        $region29: #{tpu_custom_call.1} parent=11 // pred_check
          %p353 = pneg %p153
        $region30: #{tpu_custom_call.1} parent=11 // pred_check_branch
          %355 = sbr.rel (%p353) target = $region32
        $region31: #{tpu_custom_call.1} parent=11 // pred_region
          _
        $region32: #{tpu_custom_call.1} parent=11 // pred_fallthru
          _
        // Predicated region
        $region33: #{tpu_custom_call.1} parent=11 // pred_check
          %p356 = pneg %p174
        $region34: #{tpu_custom_call.1} parent=11 // pred_check_branch
          %358 = sbr.rel (%p356) target = $region36
        $region35: #{tpu_custom_call.1} parent=11 // pred_region
          _
        $region36: #{tpu_custom_call.1} parent=11 // pred_fallthru
          _
        // Predicated region
        $region37: #{tpu_custom_call.1} parent=11 // pred_check
          %p359 = pneg %p195
        $region38: #{tpu_custom_call.1} parent=11 // pred_check_branch
          %361 = sbr.rel (%p359) target = $region40
        $region39: #{tpu_custom_call.1} parent=11 // pred_region
          _
        $region40: #{tpu_custom_call.1} parent=11 // pred_fallthru
          _
        // Predicated region
        $region41: #{tpu_custom_call.1} parent=11 // pred_check
          %p362 = pneg %p216
        $region42: #{tpu_custom_call.1} parent=11 // pred_check_branch
          %364 = sbr.rel (%p362) target = $region44
        $region43: #{tpu_custom_call.1} parent=11 // pred_region
          _
        $region44: #{tpu_custom_call.1} parent=11 // pred_fallthru
          _
        // Predicated region
        $region45: #{tpu_custom_call.1} parent=11 // pred_check
          %p365 = pneg %p237
        $region46: #{tpu_custom_call.1} parent=11 // pred_check_branch
          %367 = sbr.rel (%p365) target = $region48
        $region47: #{tpu_custom_call.1} parent=11 // pred_region
          _
        $region48: #{tpu_custom_call.1} parent=11 // pred_fallthru
          _
        // Predicated region
        $region49: #{tpu_custom_call.1} parent=11 // pred_check
          %p368 = pneg %p258
        $region50: #{tpu_custom_call.1} parent=11 // pred_check_branch
          %370 = sbr.rel (%p368) target = $region52
        $region51: #{tpu_custom_call.1} parent=11 // pred_region
          _
        $region52: #{tpu_custom_call.1} parent=11 // pred_fallthru
          _
        // Predicated region
        $region53: #{tpu_custom_call.1} parent=11 // pred_check
          %p371 = pneg %p279
        $region54: #{tpu_custom_call.1} parent=11 // pred_check_branch
          %373 = sbr.rel (%p371) target = $region56
        $region55: #{tpu_custom_call.1} parent=11 // pred_region
          _
        $region56: #{tpu_custom_call.1} parent=11 // pred_fallthru
          _
        // Predicated region
        $region57: #{tpu_custom_call.1} parent=11 // pred_check
          %p374 = pneg %p300
        $region58: #{tpu_custom_call.1} parent=11 // pred_check_branch
          %376 = sbr.rel (%p374) target = $region60
        $region59: #{tpu_custom_call.1} parent=11 // pred_region
          _
        $region60: #{tpu_custom_call.1} parent=11 // pred_fallthru
          _
      $region12: #{tpu_custom_call.1} parent=5 // pred_fallthru
        _
      %p377 = scmp.lt.s32.totalorder %s22, 2
      // Predicated region
      $region61: #{tpu_custom_call.1} parent=5 // pred_check
        %p378 = pneg %p377
      $region62: #{tpu_custom_call.1} parent=5 // pred_check_branch
        %380 = sbr.rel (%p378) target = $region64
      $region63: #{tpu_custom_call.1} parent=5 // pred_region
        // Predicated region
        $region65: #{tpu_custom_call.1} parent=63 // pred_check
          %p381 = pneg %p42
        $region66: #{tpu_custom_call.1} parent=63 // pred_check_branch
          %383 = sbr.rel (%p381) target = $region68
        $region67: #{tpu_custom_call.1} parent=63 // pred_region
          %p384 = scmp.lt.s32.totalorder %s22, 1
          %s385 = scalar_select %p384, %s22, 1
          %s386 = smul.addr %s385, 8
          %s387 = scalar_lea.vmem %s0, %s386
        $region68: #{tpu_custom_call.1} parent=63 // pred_fallthru
          _
      $region64: #{tpu_custom_call.1} parent=5 // pred_fallthru
        _
      %p388 = scmp.le.s32.totalorder 1, %s22
      %p389 = scmp.lt.s32.totalorder %s22, 3
      %p390 = pnand %p388, %p389
      %p391 = pneg %p390
      // Predicated region
      $region69: #{tpu_custom_call.1} parent=5 // pred_check
        _
      $region70: #{tpu_custom_call.1} parent=5 // pred_check_branch
        %393 = sbr.rel (%p390) target = $region72
      $region71: #{tpu_custom_call.1} parent=5 // pred_region
        %s394 = ssub.s32 %s22, 1
        %p395 = scmp.lt.s32.totalorder %s27, 1
        %s396 = scalar_select %p395, %s27, 1
        %s397 = smul.addr %s396, 8
        %s398 = scalar_lea.vmem %s0, %s397
        %p399 = pneg %p48
        %p400 = pneg %p45
        %p401 = pneg %p69
        %p402 = pneg %p66
        %p403 = pneg %p90
        %p404 = pneg %p87
        %p405 = pneg %p111
        %p406 = pneg %p108
        %p407 = pneg %p132
        %p408 = pneg %p129
        %p409 = pneg %p153
        %p410 = pneg %p150
        %p411 = pneg %p174
        %p412 = pneg %p171
        %p413 = pneg %p195
        %p414 = pneg %p192
        %p415 = pneg %p216
        %p416 = pneg %p213
        %p417 = pneg %p237
        %p418 = pneg %p234
        %p419 = pneg %p258
        %p420 = pneg %p255
        %p421 = pneg %p279
        %p422 = pneg %p276
        %p423 = pneg %p300
        %p424 = pneg %p297
        %p425 = pneg %p326
        %p426 = pneg %p323
        %s427 = sand.u32 %s313, 1
        %s428 = scalar_lea.sflag [#allocation3], %s427
        %s429 = sand.u32 %s313, 1
        %s430 = smul.addr %s429, 8
        %s431 = scalar_lea.vmem [#allocation2], %s430
        %p432 = scmp.lt.s32.totalorder %s27, 1
        %s433 = scalar_select %p432, %s27, 1
        %s434 = smul.addr %s433, 8
        %s435 = scalar_lea.vmem %s0, %s434
        %v436 = vld [vmem:[%s435] sm:$0xff]
        %v437 = vld [vmem:[%s2] sm:$0x1]
        %v438 = vld [vmem:[%s3] sm:$0x1]
        %vm439 = vcmask 523264
        %v440 = vsel %vm439, %v436, 0.0
        %441 = vadd.xlane.f32.xlu0 %v440
        %v442 = vpop.xlane.xlu0 %441
        %v443 = vrcp.pop 64.0
        %v444 = vmul.f32 %v442, %v443
        %v445 = vmul.f32 %v436, %v436
        %v446 = vsel %vm439, %v445, 0.0
        %447 = vadd.xlane.f32.xlu0 %v446
        %v448 = vpop.xlane.xlu0 %447
        %v449 = vmul.f32 %v448, %v443
        %v450 = vmul.f32 %v444, %v444
        %v451 = vsub.f32 %v449, %v450
        %v452 = vsub.f32 %v436, %v444
        %v453 = vadd.f32 %v451, 1e-05
        %v454 = vrsqrt.pop %v453
        %v455 = vmul.f32 %v452, %v454
        %v457 = vlaneseq
        %v458 = vshrl.u32 %v457, 7
        %v459 = vsub.s32 0, %v458
        %v460 = vrot.slane %v437, %v459
        %v462 = vmul.f32 %v455, %v460
        %v464 = vlaneseq
        %v465 = vshrl.u32 %v464, 7
        %v466 = vsub.s32 0, %v465
        %v467 = vrot.slane %v438, %v466
        %v469 = vadd.f32 %v462, %v467
        %v470 = vld [vmem:[%s4] sm:$0xff]
        %v471 = vld [vmem:[%s4 + $0x8] sm:$0xff]
        %v472 = vld [vmem:[%s4 + $0x10] sm:$0xff]
        %v473 = vld [vmem:[%s4 + $0x18] sm:$0xff]
        %v474 = vld [vmem:[%s4 + $0x20] sm:$0xff]
        %v475 = vld [vmem:[%s4 + $0x28] sm:$0xff]
        %v476 = vld [vmem:[%s4 + $0x30] sm:$0xff]
        %v477 = vld [vmem:[%s4 + $0x38] sm:$0xff]
        %v478 = vld [vmem:[%s4 + $0x40] sm:$0xff]
        %v479 = vld [vmem:[%s4 + $0x48] sm:$0xff]
        %v480 = vld [vmem:[%s4 + $0x50] sm:$0xff]
        %v481 = vld [vmem:[%s4 + $0x58] sm:$0xff]
        %v482 = vld [vmem:[%s4 + $0x60] sm:$0xff]
        %v483 = vld [vmem:[%s4 + $0x68] sm:$0xff]
        %v484 = vld [vmem:[%s4 + $0x70] sm:$0xff]
        %v485 = vld [vmem:[%s4 + $0x78] sm:$0xff]
        %v487 = vsel %vm439, %v469, 0
        %489 = vmatprep.subr.mxu0 %v471
        %490 = vmatpush1.msra.mxu0 %v470
        %491 = vmatprep.subr.mxu0 %v473
        %492 = vmatpush1.msra.mxu0 %v472
        %493 = vmatprep.subr.mxu0 %v475
        %494 = vmatpush1.msra.mxu0 %v474
        %495 = vmatprep.subr.mxu0 %v477
        %496 = vmatpush1.msra.mxu0 %v476
        %497 = vmatprep.subr.mxu0 %v479
        %498 = vmatpush1.msra.mxu0 %v478
        %499 = vmatprep.subr.mxu0 %v481
        %500 = vmatpush1.msra.mxu0 %v480
        %501 = vmatprep.subr.mxu0 %v483
        %502 = vmatpush1.msra.mxu0 %v482
        %503 = vmatprep.subr.mxu0 %v485
        %504 = vmatpush1.msra.mxu0 %v484
        %505 = vmatprep.subr.mxu0 0.0
        %506 = vmatpush1.msra.mxu0 0.0
        %507 = vmatprep.subr.mxu0 0.0
        %508 = vmatpush1.msra.mxu0 0.0
        %509 = vmatprep.subr.mxu0 0.0
        %510 = vmatpush1.msra.mxu0 0.0
        %511 = vmatprep.subr.mxu0 0.0
        %512 = vmatpush1.msra.mxu0 0.0
        %513 = vmatprep.subr.mxu0 0.0
        %514 = vmatpush1.msra.mxu0 0.0
        %515 = vmatprep.subr.mxu0 0.0
        %516 = vmatpush1.msra.mxu0 0.0
        %517 = vmatprep.subr.mxu0 0.0
        %518 = vmatpush1.msra.mxu0 0.0
        %519 = vmatprep.subr.mxu0 0.0
        %520 = vmatpush1.msra.mxu0 0.0
        %521 = vmatprep.subr.mxu0 0.0
        %522 = vmatpush1.msra.mxu0 0.0
        %523 = vmatprep.subr.mxu0 0.0
        %524 = vmatpush1.msra.mxu0 0.0
        %525 = vmatprep.subr.mxu0 0.0
        %526 = vmatpush1.msra.mxu0 0.0
        %527 = vmatprep.subr.mxu0 0.0
        %528 = vmatpush1.msra.mxu0 0.0
        %529 = vmatprep.subr.mxu0 0.0
        %530 = vmatpush1.msra.mxu0 0.0
        %531 = vmatprep.subr.mxu0 0.0
        %532 = vmatpush1.msra.mxu0 0.0
        %533 = vmatprep.subr.mxu0 0.0
        %534 = vmatpush1.msra.mxu0 0.0
        %535 = vmatprep.subr.mxu0 0.0
        %536 = vmatpush1.msra.mxu0 0.0
        %537 = vmatprep.subr.mxu0 0.0
        %538 = vmatpush1.msra.mxu0 0.0
        %539 = vmatprep.subr.mxu0 0.0
        %540 = vmatpush1.msra.mxu0 0.0
        %541 = vmatprep.subr.mxu0 0.0
        %542 = vmatpush1.msra.mxu0 0.0
        %543 = vmatprep.subr.mxu0 0.0
        %544 = vmatpush1.msra.mxu0 0.0
        %545 = vmatprep.subr.mxu0 0.0
        %546 = vmatpush1.msra.mxu0 0.0
        %547 = vmatprep.subr.mxu0 0.0
        %548 = vmatpush1.msra.mxu0 0.0
        %549 = vmatprep.subr.mxu0 0.0
        %550 = vmatpush1.msra.mxu0 0.0
        %551 = vmatprep.subr.mxu0 0.0
        %552 = vmatpush1.msra.mxu0 0.0
        %553 = vmatprep.mubr.f32.mxu0 0.0
        %554 = vmatmul.mubr.f32.gmra.mrb[0].mxu0 %v487
        %v555 = vpop.f32.mrb[0].mxu0
        %v556 = vadd.f32 0.0, %v555
        %v557 = vpop.f32.mrb[0].mxu0
        %v558 = vadd.f32 0.0, %v557
        %559 = vdwg.mxu0
        %v560 = vld [vmem:[%s1] sm:$0xff]
        %562 = vrot.lane.b32.xlu0 %v556, 64
        %v563 = vpop.permute.xlu0 %562
        %vm564 = vcmask 130048
        %v565 = vsel %vm564, %v556, 0
        %v567 = vsel %vm564, %v563, 0
        %569 = vmatprep.subr.mxu0 0.0
        %570 = vmatpush1.xpose.msra.mxu0 %v567
        %571 = vmatprep.subr.mxu0 0.0
        %572 = vmatpush1.xpose.msra.mxu0 0.0
        %573 = vmatprep.subr.mxu0 0.0
        %574 = vmatpush1.xpose.msra.mxu0 0.0
        %575 = vmatprep.subr.mxu0 0.0
        %576 = vmatpush1.xpose.msra.mxu0 0.0
        %577 = vmatprep.subr.mxu0 0.0
        %578 = vmatpush1.xpose.msra.mxu0 0.0
        %579 = vmatprep.subr.mxu0 0.0
        %580 = vmatpush1.xpose.msra.mxu0 0.0
        %581 = vmatprep.subr.mxu0 0.0
        %582 = vmatpush1.xpose.msra.mxu0 0.0
        %583 = vmatprep.subr.mxu0 0.0
        %584 = vmatpush1.xpose.msra.mxu0 0.0
        %585 = vmatprep.subr.mxu0 0.0
        %586 = vmatpush1.xpose.msra.mxu0 0.0
        %587 = vmatprep.subr.mxu0 0.0
        %588 = vmatpush1.xpose.msra.mxu0 0.0
        %589 = vmatprep.subr.mxu0 0.0
        %590 = vmatpush1.xpose.msra.mxu0 0.0
        %591 = vmatprep.subr.mxu0 0.0
        %592 = vmatpush1.xpose.msra.mxu0 0.0
        %593 = vmatprep.subr.mxu0 0.0
        %594 = vmatpush1.xpose.msra.mxu0 0.0
        %595 = vmatprep.subr.mxu0 0.0
        %596 = vmatpush1.xpose.msra.mxu0 0.0
        %597 = vmatprep.subr.mxu0 0.0
        %598 = vmatpush1.xpose.msra.mxu0 0.0
        %599 = vmatprep.subr.mxu0 0.0
        %600 = vmatpush1.xpose.msra.mxu0 0.0
        %601 = vmatprep.subr.mxu0 0.0
        %602 = vmatpush1.xpose.msra.mxu0 0.0
        %603 = vmatprep.subr.mxu0 0.0
        %604 = vmatpush1.xpose.msra.mxu0 0.0
        %605 = vmatprep.subr.mxu0 0.0
        %606 = vmatpush1.xpose.msra.mxu0 0.0
        %607 = vmatprep.subr.mxu0 0.0
        %608 = vmatpush1.xpose.msra.mxu0 0.0
        %609 = vmatprep.subr.mxu0 0.0
        %610 = vmatpush1.xpose.msra.mxu0 0.0
        %611 = vmatprep.subr.mxu0 0.0
        %612 = vmatpush1.xpose.msra.mxu0 0.0
        %613 = vmatprep.subr.mxu0 0.0
        %614 = vmatpush1.xpose.msra.mxu0 0.0
        %615 = vmatprep.subr.mxu0 0.0
        %616 = vmatpush1.xpose.msra.mxu0 0.0
        %617 = vmatprep.subr.mxu0 0.0
        %618 = vmatpush1.xpose.msra.mxu0 0.0
        %619 = vmatprep.subr.mxu0 0.0
        %620 = vmatpush1.xpose.msra.mxu0 0.0
        %621 = vmatprep.subr.mxu0 0.0
        %622 = vmatpush1.xpose.msra.mxu0 0.0
        %623 = vmatprep.subr.mxu0 0.0
        %624 = vmatpush1.xpose.msra.mxu0 0.0
        %625 = vmatprep.subr.mxu0 0.0
        %626 = vmatpush1.xpose.msra.mxu0 0.0
        %627 = vmatprep.subr.mxu0 0.0
        %628 = vmatpush1.xpose.msra.mxu0 0.0
        %629 = vmatprep.subr.mxu0 0.0
        %630 = vmatpush1.xpose.msra.mxu0 0.0
        %631 = vmatprep.subr.mxu0 0.0
        %632 = vmatpush1.xpose.msra.mxu0 0.0
        %633 = vmatprep.mubr.f32.mxu0 0.0
        %634 = vmatmul.mubr.f32.gmra.mrb[0].mxu0 %v565
        %v635 = vpop.f32.mrb[0].mxu0
        %v636 = vadd.f32 %v560, %v635
        %v637 = vpop.f32.mrb[0].mxu0
        %638 = vdwg.mxu0
        %vm639 = vcmask 64512
        %v640 = vsel %vm639, %v636, -inf
        %641 = vmax.xlane.f32.xlu0 %v640
        %v642 = vpop.xlane.xlu0 %641
        %v643 = vsub.f32 %v636, %v642
        %v644 = vmul.f32 %v643, 1.442695
        %v645 = vpow.pop %v644
        %v646 = vsel %vm639, %v645, 0.0
        %647 = vadd.xlane.f32.xlu0 %v646
        %v648 = vpop.xlane.xlu0 %647
        %v649 = vrcp.pop %v648
        %v650 = vmul.f32 %v645, %v649
        %v652 = vsel %vm639, %v650, 0
        %654 = vmatprep.subr.mxu0 0.0
        %655 = vmatpush1.msra.mxu0 %v558
        %656 = vmatprep.subr.mxu0 0.0
        %657 = vmatpush1.msra.mxu0 0.0
        %658 = vmatprep.subr.mxu0 0.0
        %659 = vmatpush1.msra.mxu0 0.0
        %660 = vmatprep.subr.mxu0 0.0
        %661 = vmatpush1.msra.mxu0 0.0
        %662 = vmatprep.subr.mxu0 0.0
        %663 = vmatpush1.msra.mxu0 0.0
        %664 = vmatprep.subr.mxu0 0.0
        %665 = vmatpush1.msra.mxu0 0.0
        %666 = vmatprep.subr.mxu0 0.0
        %667 = vmatpush1.msra.mxu0 0.0
        %668 = vmatprep.subr.mxu0 0.0
        %669 = vmatpush1.msra.mxu0 0.0
        %670 = vmatprep.subr.mxu0 0.0
        %671 = vmatpush1.msra.mxu0 0.0
        %672 = vmatprep.subr.mxu0 0.0
        %673 = vmatpush1.msra.mxu0 0.0
        %674 = vmatprep.subr.mxu0 0.0
        %675 = vmatpush1.msra.mxu0 0.0
        %676 = vmatprep.subr.mxu0 0.0
        %677 = vmatpush1.msra.mxu0 0.0
        %678 = vmatprep.subr.mxu0 0.0
        %679 = vmatpush1.msra.mxu0 0.0
        %680 = vmatprep.subr.mxu0 0.0
        %681 = vmatpush1.msra.mxu0 0.0
        %682 = vmatprep.subr.mxu0 0.0
        %683 = vmatpush1.msra.mxu0 0.0
        %684 = vmatprep.subr.mxu0 0.0
        %685 = vmatpush1.msra.mxu0 0.0
        %686 = vmatprep.subr.mxu0 0.0
        %687 = vmatpush1.msra.mxu0 0.0
        %688 = vmatprep.subr.mxu0 0.0
        %689 = vmatpush1.msra.mxu0 0.0
        %690 = vmatprep.subr.mxu0 0.0
        %691 = vmatpush1.msra.mxu0 0.0
        %692 = vmatprep.subr.mxu0 0.0
        %693 = vmatpush1.msra.mxu0 0.0
        %694 = vmatprep.subr.mxu0 0.0
        %695 = vmatpush1.msra.mxu0 0.0
        %696 = vmatprep.subr.mxu0 0.0
        %697 = vmatpush1.msra.mxu0 0.0
        %698 = vmatprep.subr.mxu0 0.0
        %699 = vmatpush1.msra.mxu0 0.0
        %700 = vmatprep.subr.mxu0 0.0
        %701 = vmatpush1.msra.mxu0 0.0
        %702 = vmatprep.subr.mxu0 0.0
        %703 = vmatpush1.msra.mxu0 0.0
        %704 = vmatprep.subr.mxu0 0.0
        %705 = vmatpush1.msra.mxu0 0.0
        %706 = vmatprep.subr.mxu0 0.0
        %707 = vmatpush1.msra.mxu0 0.0
        %708 = vmatprep.subr.mxu0 0.0
        %709 = vmatpush1.msra.mxu0 0.0
        %710 = vmatprep.subr.mxu0 0.0
        %711 = vmatpush1.msra.mxu0 0.0
        %712 = vmatprep.subr.mxu0 0.0
        %713 = vmatpush1.msra.mxu0 0.0
        %714 = vmatprep.subr.mxu0 0.0
        %715 = vmatpush1.msra.mxu0 0.0
        %716 = vmatprep.subr.mxu0 0.0
        %717 = vmatpush1.msra.mxu0 0.0
        %718 = vmatprep.mubr.f32.mxu0 0.0
        %719 = vmatmul.mubr.f32.gmra.mrb[0].mxu0 %v652
        %v720 = vpop.f32.mrb[0].mxu0
        %v721 = vadd.f32 0.0, %v720
        %v722 = vpop.f32.mrb[0].mxu0
        %723 = vdwg.mxu0
        %724 = vrot.lane.b32.xlu0 %v556, 112
        %v725 = vpop.permute.xlu0 %724
        %726 = vrot.lane.b32.xlu0 %v556, 48
        %v727 = vpop.permute.xlu0 %726
        %v728 = vsel %vm564, %v725, 0
        %v730 = vsel %vm564, %v727, 0
        %732 = vmatprep.subr.mxu0 0.0
        %733 = vmatpush1.xpose.msra.mxu0 %v730
        %734 = vmatprep.subr.mxu0 0.0
        %735 = vmatpush1.xpose.msra.mxu0 0.0
        %736 = vmatprep.subr.mxu0 0.0
        %737 = vmatpush1.xpose.msra.mxu0 0.0
        %738 = vmatprep.subr.mxu0 0.0
        %739 = vmatpush1.xpose.msra.mxu0 0.0
        %740 = vmatprep.subr.mxu0 0.0
        %741 = vmatpush1.xpose.msra.mxu0 0.0
        %742 = vmatprep.subr.mxu0 0.0
        %743 = vmatpush1.xpose.msra.mxu0 0.0
        %744 = vmatprep.subr.mxu0 0.0
        %745 = vmatpush1.xpose.msra.mxu0 0.0
        %746 = vmatprep.subr.mxu0 0.0
        %747 = vmatpush1.xpose.msra.mxu0 0.0
        %748 = vmatprep.subr.mxu0 0.0
        %749 = vmatpush1.xpose.msra.mxu0 0.0
        %750 = vmatprep.subr.mxu0 0.0
        %751 = vmatpush1.xpose.msra.mxu0 0.0
        %752 = vmatprep.subr.mxu0 0.0
        %753 = vmatpush1.xpose.msra.mxu0 0.0
        %754 = vmatprep.subr.mxu0 0.0
        %755 = vmatpush1.xpose.msra.mxu0 0.0
        %756 = vmatprep.subr.mxu0 0.0
        %757 = vmatpush1.xpose.msra.mxu0 0.0
        %758 = vmatprep.subr.mxu0 0.0
        %759 = vmatpush1.xpose.msra.mxu0 0.0
        %760 = vmatprep.subr.mxu0 0.0
        %761 = vmatpush1.xpose.msra.mxu0 0.0
        %762 = vmatprep.subr.mxu0 0.0
        %763 = vmatpush1.xpose.msra.mxu0 0.0
        %764 = vmatprep.subr.mxu0 0.0
        %765 = vmatpush1.xpose.msra.mxu0 0.0
        %766 = vmatprep.subr.mxu0 0.0
        %767 = vmatpush1.xpose.msra.mxu0 0.0
        %768 = vmatprep.subr.mxu0 0.0
        %769 = vmatpush1.xpose.msra.mxu0 0.0
        %770 = vmatprep.subr.mxu0 0.0
        %771 = vmatpush1.xpose.msra.mxu0 0.0
        %772 = vmatprep.subr.mxu0 0.0
        %773 = vmatpush1.xpose.msra.mxu0 0.0
        %774 = vmatprep.subr.mxu0 0.0
        %775 = vmatpush1.xpose.msra.mxu0 0.0
        %776 = vmatprep.subr.mxu0 0.0
        %777 = vmatpush1.xpose.msra.mxu0 0.0
        %778 = vmatprep.subr.mxu0 0.0
        %779 = vmatpush1.xpose.msra.mxu0 0.0
        %780 = vmatprep.subr.mxu0 0.0
        %781 = vmatpush1.xpose.msra.mxu0 0.0
        %782 = vmatprep.subr.mxu0 0.0
        %783 = vmatpush1.xpose.msra.mxu0 0.0
        %784 = vmatprep.subr.mxu0 0.0
        %785 = vmatpush1.xpose.msra.mxu0 0.0
        %786 = vmatprep.subr.mxu0 0.0
        %787 = vmatpush1.xpose.msra.mxu0 0.0
        %788 = vmatprep.subr.mxu0 0.0
        %789 = vmatpush1.xpose.msra.mxu0 0.0
        %790 = vmatprep.subr.mxu0 0.0
        %791 = vmatpush1.xpose.msra.mxu0 0.0
        %792 = vmatprep.subr.mxu0 0.0
        %793 = vmatpush1.xpose.msra.mxu0 0.0
        %794 = vmatprep.subr.mxu0 0.0
        %795 = vmatpush1.xpose.msra.mxu0 0.0
        %796 = vmatprep.mubr.f32.mxu0 0.0
        %797 = vmatmul.mubr.f32.gmra.mrb[0].mxu0 %v728
        %v798 = vpop.f32.mrb[0].mxu0
        %v799 = vadd.f32 %v560, %v798
        %v800 = vpop.f32.mrb[0].mxu0
        %801 = vdwg.mxu0
        %v802 = vsel %vm639, %v799, -inf
        %803 = vmax.xlane.f32.xlu0 %v802
        %v804 = vpop.xlane.xlu0 %803
        %v805 = vsub.f32 %v799, %v804
        %v806 = vmul.f32 %v805, 1.442695
        %v807 = vpow.pop %v806
        %v808 = vsel %vm639, %v807, 0.0
        %809 = vadd.xlane.f32.xlu0 %v808
        %v810 = vpop.xlane.xlu0 %809
        %v811 = vrcp.pop %v810
        %v812 = vmul.f32 %v807, %v811
        %814 = vrot.lane.b32.xlu0 %v558, 112
        %v815 = vpop.permute.xlu0 %814
        %v818 = vsel %vm639, %v812, 0
        %820 = vmatprep.subr.mxu0 0.0
        %821 = vmatpush1.msra.mxu0 %v815
        %822 = vmatprep.subr.mxu0 0.0
        %823 = vmatpush1.msra.mxu0 0.0
        %824 = vmatprep.subr.mxu0 0.0
        %825 = vmatpush1.msra.mxu0 0.0
        %826 = vmatprep.subr.mxu0 0.0
        %827 = vmatpush1.msra.mxu0 0.0
        %828 = vmatprep.subr.mxu0 0.0
        %829 = vmatpush1.msra.mxu0 0.0
        %830 = vmatprep.subr.mxu0 0.0
        %831 = vmatpush1.msra.mxu0 0.0
        %832 = vmatprep.subr.mxu0 0.0
        %833 = vmatpush1.msra.mxu0 0.0
        %834 = vmatprep.subr.mxu0 0.0
        %835 = vmatpush1.msra.mxu0 0.0
        %836 = vmatprep.subr.mxu0 0.0
        %837 = vmatpush1.msra.mxu0 0.0
        %838 = vmatprep.subr.mxu0 0.0
        %839 = vmatpush1.msra.mxu0 0.0
        %840 = vmatprep.subr.mxu0 0.0
        %841 = vmatpush1.msra.mxu0 0.0
        %842 = vmatprep.subr.mxu0 0.0
        %843 = vmatpush1.msra.mxu0 0.0
        %844 = vmatprep.subr.mxu0 0.0
        %845 = vmatpush1.msra.mxu0 0.0
        %846 = vmatprep.subr.mxu0 0.0
        %847 = vmatpush1.msra.mxu0 0.0
        %848 = vmatprep.subr.mxu0 0.0
        %849 = vmatpush1.msra.mxu0 0.0
        %850 = vmatprep.subr.mxu0 0.0
        %851 = vmatpush1.msra.mxu0 0.0
        %852 = vmatprep.subr.mxu0 0.0
        %853 = vmatpush1.msra.mxu0 0.0
        %854 = vmatprep.subr.mxu0 0.0
        %855 = vmatpush1.msra.mxu0 0.0
        %856 = vmatprep.subr.mxu0 0.0
        %857 = vmatpush1.msra.mxu0 0.0
        %858 = vmatprep.subr.mxu0 0.0
        %859 = vmatpush1.msra.mxu0 0.0
        %860 = vmatprep.subr.mxu0 0.0
        %861 = vmatpush1.msra.mxu0 0.0
        %862 = vmatprep.subr.mxu0 0.0
        %863 = vmatpush1.msra.mxu0 0.0
        %864 = vmatprep.subr.mxu0 0.0
        %865 = vmatpush1.msra.mxu0 0.0
        %866 = vmatprep.subr.mxu0 0.0
        %867 = vmatpush1.msra.mxu0 0.0
        %868 = vmatprep.subr.mxu0 0.0
        %869 = vmatpush1.msra.mxu0 0.0
        %870 = vmatprep.subr.mxu0 0.0
        %871 = vmatpush1.msra.mxu0 0.0
        %872 = vmatprep.subr.mxu0 0.0
        %873 = vmatpush1.msra.mxu0 0.0
        %874 = vmatprep.subr.mxu0 0.0
        %875 = vmatpush1.msra.mxu0 0.0
        %876 = vmatprep.subr.mxu0 0.0
        %877 = vmatpush1.msra.mxu0 0.0
        %878 = vmatprep.subr.mxu0 0.0
        %879 = vmatpush1.msra.mxu0 0.0
        %880 = vmatprep.subr.mxu0 0.0
        %881 = vmatpush1.msra.mxu0 0.0
        %882 = vmatprep.subr.mxu0 0.0
        %883 = vmatpush1.msra.mxu0 0.0
        %884 = vmatprep.mubr.f32.mxu0 0.0
        %885 = vmatmul.mubr.f32.gmra.mrb[0].mxu0 %v818
        %v886 = vpop.f32.mrb[0].mxu0
        %v887 = vadd.f32 0.0, %v886
        %v888 = vpop.f32.mrb[0].mxu0
        %889 = vdwg.mxu0
        %890 = vrot.lane.b32.xlu0 %v556, 96
        %v891 = vpop.permute.xlu0 %890
        %892 = vrot.lane.b32.xlu0 %v556, 32
        %v893 = vpop.permute.xlu0 %892
        %v894 = vsel %vm564, %v891, 0
        %v896 = vsel %vm564, %v893, 0
        %898 = vmatprep.subr.mxu0 0.0
        %899 = vmatpush1.xpose.msra.mxu0 %v896
        %900 = vmatprep.subr.mxu0 0.0
        %901 = vmatpush1.xpose.msra.mxu0 0.0
        %902 = vmatprep.subr.mxu0 0.0
        %903 = vmatpush1.xpose.msra.mxu0 0.0
        %904 = vmatprep.subr.mxu0 0.0
        %905 = vmatpush1.xpose.msra.mxu0 0.0
        %906 = vmatprep.subr.mxu0 0.0
        %907 = vmatpush1.xpose.msra.mxu0 0.0
        %908 = vmatprep.subr.mxu0 0.0
        %909 = vmatpush1.xpose.msra.mxu0 0.0
        %910 = vmatprep.subr.mxu0 0.0
        %911 = vmatpush1.xpose.msra.mxu0 0.0
        %912 = vmatprep.subr.mxu0 0.0
        %913 = vmatpush1.xpose.msra.mxu0 0.0
        %914 = vmatprep.subr.mxu0 0.0
        %915 = vmatpush1.xpose.msra.mxu0 0.0
        %916 = vmatprep.subr.mxu0 0.0
        %917 = vmatpush1.xpose.msra.mxu0 0.0
        %918 = vmatprep.subr.mxu0 0.0
        %919 = vmatpush1.xpose.msra.mxu0 0.0
        %920 = vmatprep.subr.mxu0 0.0
        %921 = vmatpush1.xpose.msra.mxu0 0.0
        %922 = vmatprep.subr.mxu0 0.0
        %923 = vmatpush1.xpose.msra.mxu0 0.0
        %924 = vmatprep.subr.mxu0 0.0
        %925 = vmatpush1.xpose.msra.mxu0 0.0
        %926 = vmatprep.subr.mxu0 0.0
        %927 = vmatpush1.xpose.msra.mxu0 0.0
        %928 = vmatprep.subr.mxu0 0.0
        %929 = vmatpush1.xpose.msra.mxu0 0.0
        %930 = vmatprep.subr.mxu0 0.0
        %931 = vmatpush1.xpose.msra.mxu0 0.0
        %932 = vmatprep.subr.mxu0 0.0
        %933 = vmatpush1.xpose.msra.mxu0 0.0
        %934 = vmatprep.subr.mxu0 0.0
        %935 = vmatpush1.xpose.msra.mxu0 0.0
        %936 = vmatprep.subr.mxu0 0.0
        %937 = vmatpush1.xpose.msra.mxu0 0.0
        %938 = vmatprep.subr.mxu0 0.0
        %939 = vmatpush1.xpose.msra.mxu0 0.0
        %940 = vmatprep.subr.mxu0 0.0
        %941 = vmatpush1.xpose.msra.mxu0 0.0
        %942 = vmatprep.subr.mxu0 0.0
        %943 = vmatpush1.xpose.msra.mxu0 0.0
        %944 = vmatprep.subr.mxu0 0.0
        %945 = vmatpush1.xpose.msra.mxu0 0.0
        %946 = vmatprep.subr.mxu0 0.0
        %947 = vmatpush1.xpose.msra.mxu0 0.0
        %948 = vmatprep.subr.mxu0 0.0
        %949 = vmatpush1.xpose.msra.mxu0 0.0
        %950 = vmatprep.subr.mxu0 0.0
        %951 = vmatpush1.xpose.msra.mxu0 0.0
        %952 = vmatprep.subr.mxu0 0.0
        %953 = vmatpush1.xpose.msra.mxu0 0.0
        %954 = vmatprep.subr.mxu0 0.0
        %955 = vmatpush1.xpose.msra.mxu0 0.0
        %956 = vmatprep.subr.mxu0 0.0
        %957 = vmatpush1.xpose.msra.mxu0 0.0
        %958 = vmatprep.subr.mxu0 0.0
        %959 = vmatpush1.xpose.msra.mxu0 0.0
        %960 = vmatprep.subr.mxu0 0.0
        %961 = vmatpush1.xpose.msra.mxu0 0.0
        %962 = vmatprep.mubr.f32.mxu0 0.0
        %963 = vmatmul.mubr.f32.gmra.mrb[0].mxu0 %v894
        %v964 = vpop.f32.mrb[0].mxu0
        %v965 = vadd.f32 %v560, %v964
        %v966 = vpop.f32.mrb[0].mxu0
        %967 = vdwg.mxu0
        %v968 = vsel %vm639, %v965, -inf
        %969 = vmax.xlane.f32.xlu0 %v968
        %v970 = vpop.xlane.xlu0 %969
        %v971 = vsub.f32 %v965, %v970
        %v972 = vmul.f32 %v971, 1.442695
        %v973 = vpow.pop %v972
        %v974 = vsel %vm639, %v973, 0.0
        %975 = vadd.xlane.f32.xlu0 %v974
        %v976 = vpop.xlane.xlu0 %975
        %v977 = vrcp.pop %v976
        %v978 = vmul.f32 %v973, %v977
        %979 = vrot.lane.b32.xlu0 %v558, 96
        %v980 = vpop.permute.xlu0 %979
        %v983 = vsel %vm639, %v978, 0
        %985 = vmatprep.subr.mxu0 0.0
        %986 = vmatpush1.msra.mxu0 %v980
        %987 = vmatprep.subr.mxu0 0.0
        %988 = vmatpush1.msra.mxu0 0.0
        %989 = vmatprep.subr.mxu0 0.0
        %990 = vmatpush1.msra.mxu0 0.0
        %991 = vmatprep.subr.mxu0 0.0
        %992 = vmatpush1.msra.mxu0 0.0
        %993 = vmatprep.subr.mxu0 0.0
        %994 = vmatpush1.msra.mxu0 0.0
        %995 = vmatprep.subr.mxu0 0.0
        %996 = vmatpush1.msra.mxu0 0.0
        %997 = vmatprep.subr.mxu0 0.0
        %998 = vmatpush1.msra.mxu0 0.0
        %999 = vmatprep.subr.mxu0 0.0
        %1000 = vmatpush1.msra.mxu0 0.0
        %1001 = vmatprep.subr.mxu0 0.0
        %1002 = vmatpush1.msra.mxu0 0.0
        %1003 = vmatprep.subr.mxu0 0.0
        %1004 = vmatpush1.msra.mxu0 0.0
        %1005 = vmatprep.subr.mxu0 0.0
        %1006 = vmatpush1.msra.mxu0 0.0
        %1007 = vmatprep.subr.mxu0 0.0
        %1008 = vmatpush1.msra.mxu0 0.0
        %1009 = vmatprep.subr.mxu0 0.0
        %1010 = vmatpush1.msra.mxu0 0.0
        %1011 = vmatprep.subr.mxu0 0.0
        %1012 = vmatpush1.msra.mxu0 0.0
        %1013 = vmatprep.subr.mxu0 0.0
        %1014 = vmatpush1.msra.mxu0 0.0
        %1015 = vmatprep.subr.mxu0 0.0
        %1016 = vmatpush1.msra.mxu0 0.0
        %1017 = vmatprep.subr.mxu0 0.0
        %1018 = vmatpush1.msra.mxu0 0.0
        %1019 = vmatprep.subr.mxu0 0.0
        %1020 = vmatpush1.msra.mxu0 0.0
        %1021 = vmatprep.subr.mxu0 0.0
        %1022 = vmatpush1.msra.mxu0 0.0
        %1023 = vmatprep.subr.mxu0 0.0
        %1024 = vmatpush1.msra.mxu0 0.0
        %1025 = vmatprep.subr.mxu0 0.0
        %1026 = vmatpush1.msra.mxu0 0.0
        %1027 = vmatprep.subr.mxu0 0.0
        %1028 = vmatpush1.msra.mxu0 0.0
        %1029 = vmatprep.subr.mxu0 0.0
        %1030 = vmatpush1.msra.mxu0 0.0
        %1031 = vmatprep.subr.mxu0 0.0
        %1032 = vmatpush1.msra.mxu0 0.0
        %1033 = vmatprep.subr.mxu0 0.0
        %1034 = vmatpush1.msra.mxu0 0.0
        %1035 = vmatprep.subr.mxu0 0.0
        %1036 = vmatpush1.msra.mxu0 0.0
        %1037 = vmatprep.subr.mxu0 0.0
        %1038 = vmatpush1.msra.mxu0 0.0
        %1039 = vmatprep.subr.mxu0 0.0
        %1040 = vmatpush1.msra.mxu0 0.0
        %1041 = vmatprep.subr.mxu0 0.0
        %1042 = vmatpush1.msra.mxu0 0.0
        %1043 = vmatprep.subr.mxu0 0.0
        %1044 = vmatpush1.msra.mxu0 0.0
        %1045 = vmatprep.subr.mxu0 0.0
        %1046 = vmatpush1.msra.mxu0 0.0
        %1047 = vmatprep.subr.mxu0 0.0
        %1048 = vmatpush1.msra.mxu0 0.0
        %1049 = vmatprep.mubr.f32.mxu0 0.0
        %1050 = vmatmul.mubr.f32.gmra.mrb[0].mxu0 %v983
        %v1051 = vpop.f32.mrb[0].mxu0
        %v1052 = vadd.f32 0.0, %v1051
        %v1053 = vpop.f32.mrb[0].mxu0
        %1054 = vdwg.mxu0
        %1055 = vrot.lane.b32.xlu0 %v556, 80
        %v1056 = vpop.permute.xlu0 %1055
        %1057 = vrot.lane.b32.xlu0 %v556, 16
        %v1058 = vpop.permute.xlu0 %1057
        %v1059 = vsel %vm564, %v1056, 0
        %v1061 = vsel %vm564, %v1058, 0
        %1063 = vmatprep.subr.mxu0 0.0
        %1064 = vmatpush1.xpose.msra.mxu0 %v1061
        %1065 = vmatprep.subr.mxu0 0.0
        %1066 = vmatpush1.xpose.msra.mxu0 0.0
        %1067 = vmatprep.subr.mxu0 0.0
        %1068 = vmatpush1.xpose.msra.mxu0 0.0
        %1069 = vmatprep.subr.mxu0 0.0
        %1070 = vmatpush1.xpose.msra.mxu0 0.0
        %1071 = vmatprep.subr.mxu0 0.0
        %1072 = vmatpush1.xpose.msra.mxu0 0.0
        %1073 = vmatprep.subr.mxu0 0.0
        %1074 = vmatpush1.xpose.msra.mxu0 0.0
        %1075 = vmatprep.subr.mxu0 0.0
        %1076 = vmatpush1.xpose.msra.mxu0 0.0
        %1077 = vmatprep.subr.mxu0 0.0
        %1078 = vmatpush1.xpose.msra.mxu0 0.0
        %1079 = vmatprep.subr.mxu0 0.0
        %1080 = vmatpush1.xpose.msra.mxu0 0.0
        %1081 = vmatprep.subr.mxu0 0.0
        %1082 = vmatpush1.xpose.msra.mxu0 0.0
        %1083 = vmatprep.subr.mxu0 0.0
        %1084 = vmatpush1.xpose.msra.mxu0 0.0
        %1085 = vmatprep.subr.mxu0 0.0
        %1086 = vmatpush1.xpose.msra.mxu0 0.0
        %1087 = vmatprep.subr.mxu0 0.0
        %1088 = vmatpush1.xpose.msra.mxu0 0.0
        %1089 = vmatprep.subr.mxu0 0.0
        %1090 = vmatpush1.xpose.msra.mxu0 0.0
        %1091 = vmatprep.subr.mxu0 0.0
        %1092 = vmatpush1.xpose.msra.mxu0 0.0
        %1093 = vmatprep.subr.mxu0 0.0
        %1094 = vmatpush1.xpose.msra.mxu0 0.0
        %1095 = vmatprep.subr.mxu0 0.0
        %1096 = vmatpush1.xpose.msra.mxu0 0.0
        %1097 = vmatprep.subr.mxu0 0.0
        %1098 = vmatpush1.xpose.msra.mxu0 0.0
        %1099 = vmatprep.subr.mxu0 0.0
        %1100 = vmatpush1.xpose.msra.mxu0 0.0
        %1101 = vmatprep.subr.mxu0 0.0
        %1102 = vmatpush1.xpose.msra.mxu0 0.0
        %1103 = vmatprep.subr.mxu0 0.0
        %1104 = vmatpush1.xpose.msra.mxu0 0.0
        %1105 = vmatprep.subr.mxu0 0.0
        %1106 = vmatpush1.xpose.msra.mxu0 0.0
        %1107 = vmatprep.subr.mxu0 0.0
        %1108 = vmatpush1.xpose.msra.mxu0 0.0
        %1109 = vmatprep.subr.mxu0 0.0
        %1110 = vmatpush1.xpose.msra.mxu0 0.0
        %1111 = vmatprep.subr.mxu0 0.0
        %1112 = vmatpush1.xpose.msra.mxu0 0.0
        %1113 = vmatprep.subr.mxu0 0.0
        %1114 = vmatpush1.xpose.msra.mxu0 0.0
        %1115 = vmatprep.subr.mxu0 0.0
        %1116 = vmatpush1.xpose.msra.mxu0 0.0
        %1117 = vmatprep.subr.mxu0 0.0
        %1118 = vmatpush1.xpose.msra.mxu0 0.0
        %1119 = vmatprep.subr.mxu0 0.0
        %1120 = vmatpush1.xpose.msra.mxu0 0.0
        %1121 = vmatprep.subr.mxu0 0.0
        %1122 = vmatpush1.xpose.msra.mxu0 0.0
        %1123 = vmatprep.subr.mxu0 0.0
        %1124 = vmatpush1.xpose.msra.mxu0 0.0
        %1125 = vmatprep.subr.mxu0 0.0
        %1126 = vmatpush1.xpose.msra.mxu0 0.0
        %1127 = vmatprep.mubr.f32.mxu0 0.0
        %1128 = vmatmul.mubr.f32.gmra.mrb[0].mxu0 %v1059
        %v1129 = vpop.f32.mrb[0].mxu0
        %v1130 = vadd.f32 %v560, %v1129
        %v1131 = vpop.f32.mrb[0].mxu0
        %1132 = vdwg.mxu0
        %v1133 = vsel %vm639, %v1130, -inf
        %1134 = vmax.xlane.f32.xlu0 %v1133
        %v1135 = vpop.xlane.xlu0 %1134
        %v1136 = vsub.f32 %v1130, %v1135
        %v1137 = vmul.f32 %v1136, 1.442695
        %v1138 = vpow.pop %v1137
        %v1139 = vsel %vm639, %v1138, 0.0
        %1140 = vadd.xlane.f32.xlu0 %v1139
        %v1141 = vpop.xlane.xlu0 %1140
        %v1142 = vrcp.pop %v1141
        %v1143 = vmul.f32 %v1138, %v1142
        %1144 = vrot.lane.b32.xlu0 %v558, 80
        %v1145 = vpop.permute.xlu0 %1144
        %v1148 = vsel %vm639, %v1143, 0
        %1150 = vmatprep.subr.mxu0 0.0
        %1151 = vmatpush1.msra.mxu0 %v1145
        %1152 = vmatprep.subr.mxu0 0.0
        %1153 = vmatpush1.msra.mxu0 0.0
        %1154 = vmatprep.subr.mxu0 0.0
        %1155 = vmatpush1.msra.mxu0 0.0
        %1156 = vmatprep.subr.mxu0 0.0
        %1157 = vmatpush1.msra.mxu0 0.0
        %1158 = vmatprep.subr.mxu0 0.0
        %1159 = vmatpush1.msra.mxu0 0.0
        %1160 = vmatprep.subr.mxu0 0.0
        %1161 = vmatpush1.msra.mxu0 0.0
        %1162 = vmatprep.subr.mxu0 0.0
        %1163 = vmatpush1.msra.mxu0 0.0
        %1164 = vmatprep.subr.mxu0 0.0
        %1165 = vmatpush1.msra.mxu0 0.0
        %1166 = vmatprep.subr.mxu0 0.0
        %1167 = vmatpush1.msra.mxu0 0.0
        %1168 = vmatprep.subr.mxu0 0.0
        %1169 = vmatpush1.msra.mxu0 0.0
        %1170 = vmatprep.subr.mxu0 0.0
        %1171 = vmatpush1.msra.mxu0 0.0
        %1172 = vmatprep.subr.mxu0 0.0
        %1173 = vmatpush1.msra.mxu0 0.0
        %1174 = vmatprep.subr.mxu0 0.0
        %1175 = vmatpush1.msra.mxu0 0.0
        %1176 = vmatprep.subr.mxu0 0.0
        %1177 = vmatpush1.msra.mxu0 0.0
        %1178 = vmatprep.subr.mxu0 0.0
        %1179 = vmatpush1.msra.mxu0 0.0
        %1180 = vmatprep.subr.mxu0 0.0
        %1181 = vmatpush1.msra.mxu0 0.0
        %1182 = vmatprep.subr.mxu0 0.0
        %1183 = vmatpush1.msra.mxu0 0.0
        %1184 = vmatprep.subr.mxu0 0.0
        %1185 = vmatpush1.msra.mxu0 0.0
        %1186 = vmatprep.subr.mxu0 0.0
        %1187 = vmatpush1.msra.mxu0 0.0
        %1188 = vmatprep.subr.mxu0 0.0
        %1189 = vmatpush1.msra.mxu0 0.0
        %1190 = vmatprep.subr.mxu0 0.0
        %1191 = vmatpush1.msra.mxu0 0.0
        %1192 = vmatprep.subr.mxu0 0.0
        %1193 = vmatpush1.msra.mxu0 0.0
        %1194 = vmatprep.subr.mxu0 0.0
        %1195 = vmatpush1.msra.mxu0 0.0
        %1196 = vmatprep.subr.mxu0 0.0
        %1197 = vmatpush1.msra.mxu0 0.0
        %1198 = vmatprep.subr.mxu0 0.0
        %1199 = vmatpush1.msra.mxu0 0.0
        %1200 = vmatprep.subr.mxu0 0.0
        %1201 = vmatpush1.msra.mxu0 0.0
        %1202 = vmatprep.subr.mxu0 0.0
        %1203 = vmatpush1.msra.mxu0 0.0
        %1204 = vmatprep.subr.mxu0 0.0
        %1205 = vmatpush1.msra.mxu0 0.0
        %1206 = vmatprep.subr.mxu0 0.0
        %1207 = vmatpush1.msra.mxu0 0.0
        %1208 = vmatprep.subr.mxu0 0.0
        %1209 = vmatpush1.msra.mxu0 0.0
        %1210 = vmatprep.subr.mxu0 0.0
        %1211 = vmatpush1.msra.mxu0 0.0
        %1212 = vmatprep.subr.mxu0 0.0
        %1213 = vmatpush1.msra.mxu0 0.0
        %1214 = vmatprep.mubr.f32.mxu0 0.0
        %1215 = vmatmul.mubr.f32.gmra.mrb[0].mxu0 %v1148
        %v1216 = vpop.f32.mrb[0].mxu0
        %v1217 = vadd.f32 0.0, %v1216
        %v1218 = vpop.f32.mrb[0].mxu0
        %1219 = vdwg.mxu0
        %1221 = vrot.lane.b32.xlu0 %v887, 16
        %v1222 = vpop.permute.xlu0 %1221
        %1225 = vrot.lane.b32.xlu0 %v1052, 32
        %v1226 = vpop.permute.xlu0 %1225
        %1229 = vrot.lane.b32.xlu0 %v1217, 48
        %v1230 = vpop.permute.xlu0 %1229
        %v1232 = vsel %vm564, %v721, %v1222
        %vm1233 = vcmask 261120
        %v1234 = vsel %vm1233, %v1232, %v1226
        %vm1235 = vcmask 392192
        %v1236 = vsel %vm1235, %v1234, %v1230
        %v1237 = vld [vmem:[%s5] sm:$0xff]
        %v1238 = vld [vmem:[%s5 + $0x8] sm:$0xff]
        %v1239 = vld [vmem:[%s5 + $0x10] sm:$0xff]
        %v1240 = vld [vmem:[%s5 + $0x18] sm:$0xff]
        %v1241 = vld [vmem:[%s5 + $0x20] sm:$0xff]
        %v1242 = vld [vmem:[%s5 + $0x28] sm:$0xff]
        %v1243 = vld [vmem:[%s5 + $0x30] sm:$0xff]
        %v1244 = vld [vmem:[%s5 + $0x38] sm:$0xff]
        %v1245 = vld [vmem:[%s6] sm:$0x1]
        %v1247 = vlaneseq
        %v1248 = vshrl.u32 %v1247, 7
        %v1249 = vsub.s32 0, %v1248
        %v1250 = vrot.slane %v1245, %v1249
        %v1253 = vsel %vm439, %v1236, 0
        %1255 = vmatprep.subr.mxu0 0.0
        %1256 = vmatpush1.msra.mxu0 %v1237
        %1257 = vmatprep.subr.mxu0 0.0
        %1258 = vmatpush1.msra.mxu0 %v1238
        %1259 = vmatprep.subr.mxu0 0.0
        %1260 = vmatpush1.msra.mxu0 %v1239
        %1261 = vmatprep.subr.mxu0 0.0
        %1262 = vmatpush1.msra.mxu0 %v1240
        %1263 = vmatprep.subr.mxu0 0.0
        %1264 = vmatpush1.msra.mxu0 %v1241
        %1265 = vmatprep.subr.mxu0 0.0
        %1266 = vmatpush1.msra.mxu0 %v1242
        %1267 = vmatprep.subr.mxu0 0.0
        %1268 = vmatpush1.msra.mxu0 %v1243
        %1269 = vmatprep.subr.mxu0 0.0
        %1270 = vmatpush1.msra.mxu0 %v1244
        %1271 = vmatprep.subr.mxu0 0.0
        %1272 = vmatpush1.msra.mxu0 0.0
        %1273 = vmatprep.subr.mxu0 0.0
        %1274 = vmatpush1.msra.mxu0 0.0
        %1275 = vmatprep.subr.mxu0 0.0
        %1276 = vmatpush1.msra.mxu0 0.0
        %1277 = vmatprep.subr.mxu0 0.0
        %1278 = vmatpush1.msra.mxu0 0.0
        %1279 = vmatprep.subr.mxu0 0.0
        %1280 = vmatpush1.msra.mxu0 0.0
        %1281 = vmatprep.subr.mxu0 0.0
        %1282 = vmatpush1.msra.mxu0 0.0
        %1283 = vmatprep.subr.mxu0 0.0
        %1284 = vmatpush1.msra.mxu0 0.0
        %1285 = vmatprep.subr.mxu0 0.0
        %1286 = vmatpush1.msra.mxu0 0.0
        %1287 = vmatprep.subr.mxu0 0.0
        %1288 = vmatpush1.msra.mxu0 0.0
        %1289 = vmatprep.subr.mxu0 0.0
        %1290 = vmatpush1.msra.mxu0 0.0
        %1291 = vmatprep.subr.mxu0 0.0
        %1292 = vmatpush1.msra.mxu0 0.0
        %1293 = vmatprep.subr.mxu0 0.0
        %1294 = vmatpush1.msra.mxu0 0.0
        %1295 = vmatprep.subr.mxu0 0.0
        %1296 = vmatpush1.msra.mxu0 0.0
        %1297 = vmatprep.subr.mxu0 0.0
        %1298 = vmatpush1.msra.mxu0 0.0
        %1299 = vmatprep.subr.mxu0 0.0
        %1300 = vmatpush1.msra.mxu0 0.0
        %1301 = vmatprep.subr.mxu0 0.0
        %1302 = vmatpush1.msra.mxu0 0.0
        %1303 = vmatprep.subr.mxu0 0.0
        %1304 = vmatpush1.msra.mxu0 0.0
        %1305 = vmatprep.subr.mxu0 0.0
        %1306 = vmatpush1.msra.mxu0 0.0
        %1307 = vmatprep.subr.mxu0 0.0
        %1308 = vmatpush1.msra.mxu0 0.0
        %1309 = vmatprep.subr.mxu0 0.0
        %1310 = vmatpush1.msra.mxu0 0.0
        %1311 = vmatprep.subr.mxu0 0.0
        %1312 = vmatpush1.msra.mxu0 0.0
        %1313 = vmatprep.subr.mxu0 0.0
        %1314 = vmatpush1.msra.mxu0 0.0
        %1315 = vmatprep.subr.mxu0 0.0
        %1316 = vmatpush1.msra.mxu0 0.0
        %1317 = vmatprep.subr.mxu0 0.0
        %1318 = vmatpush1.msra.mxu0 0.0
        %1319 = vmatprep.mubr.f32.mxu0 0.0
        %1320 = vmatmul.mubr.f32.gmra.mrb[0].mxu0 %v1253
        %v1321 = vpop.f32.mrb[0].mxu0
        %v1322 = vadd.f32 %v1250, %v1321
        %v1323 = vpop.f32.mrb[0].mxu0
        %1324 = vdwg.mxu0
        %v1325 = vadd.f32 %v436, %v1322
        %v1326 = vld [vmem:[%s7] sm:$0x1]
        %v1327 = vld [vmem:[%s8] sm:$0x1]
        %v1328 = vsel %vm439, %v1325, 0.0
        %1329 = vadd.xlane.f32.xlu0 %v1328
        %v1330 = vpop.xlane.xlu0 %1329
        %v1331 = vmul.f32 %v1330, %v443
        %v1332 = vmul.f32 %v1325, %v1325
        %v1333 = vsel %vm439, %v1332, 0.0
        %1334 = vadd.xlane.f32.xlu0 %v1333
        %v1335 = vpop.xlane.xlu0 %1334
        %v1336 = vmul.f32 %v1335, %v443
        %v1337 = vmul.f32 %v1331, %v1331
        %v1338 = vsub.f32 %v1336, %v1337
        %v1339 = vsub.f32 %v1325, %v1331
        %v1340 = vadd.f32 %v1338, 1e-05
        %v1341 = vrsqrt.pop %v1340
        %v1342 = vmul.f32 %v1339, %v1341
        %v1344 = vlaneseq
        %v1345 = vshrl.u32 %v1344, 7
        %v1346 = vsub.s32 0, %v1345
        %v1347 = vrot.slane %v1326, %v1346
        %v1349 = vmul.f32 %v1342, %v1347
        %v1351 = vlaneseq
        %v1352 = vshrl.u32 %v1351, 7
        %v1353 = vsub.s32 0, %v1352
        %v1354 = vrot.slane %v1327, %v1353
        %v1356 = vadd.f32 %v1349, %v1354
        %v1357 = vld [vmem:[%s9] sm:$0xff]
        %v1358 = vld [vmem:[%s9 + $0x8] sm:$0xff]
        %v1359 = vld [vmem:[%s9 + $0x10] sm:$0xff]
        %v1360 = vld [vmem:[%s9 + $0x18] sm:$0xff]
        %v1361 = vld [vmem:[%s9 + $0x20] sm:$0xff]
        %v1362 = vld [vmem:[%s9 + $0x28] sm:$0xff]
        %v1363 = vld [vmem:[%s9 + $0x30] sm:$0xff]
        %v1364 = vld [vmem:[%s9 + $0x38] sm:$0xff]
        %v1365 = vld [vmem:[%s9 + $0x40] sm:$0xff]
        %v1366 = vld [vmem:[%s9 + $0x48] sm:$0xff]
        %v1367 = vld [vmem:[%s9 + $0x50] sm:$0xff]
        %v1368 = vld [vmem:[%s9 + $0x58] sm:$0xff]
        %v1369 = vld [vmem:[%s9 + $0x60] sm:$0xff]
        %v1370 = vld [vmem:[%s9 + $0x68] sm:$0xff]
        %v1371 = vld [vmem:[%s9 + $0x70] sm:$0xff]
        %v1372 = vld [vmem:[%s9 + $0x78] sm:$0xff]
        %v1373 = vld [vmem:[%s10] sm:$0x3]
        %v1375 = vlaneseq
        %v1376 = vshrl.u32 %v1375, 7
        %v1377 = vsub.s32 0, %v1376
        %v1378 = vrot.slane %v1373, %v1377
        %v1379 = vlaneseq
        %v1380 = vshrl.u32 %v1379, 7
        %v1381 = vsub.s32 1, %v1380
        %v1382 = vrot.slane %v1373, %v1381
        %v1386 = vsel %vm439, %v1356, 0
        %1388 = vmatprep.subr.mxu0 %v1358
        %1389 = vmatpush1.msra.mxu0 %v1357
        %1390 = vmatprep.subr.mxu0 %v1360
        %1391 = vmatpush1.msra.mxu0 %v1359
        %1392 = vmatprep.subr.mxu0 %v1362
        %1393 = vmatpush1.msra.mxu0 %v1361
        %1394 = vmatprep.subr.mxu0 %v1364
        %1395 = vmatpush1.msra.mxu0 %v1363
        %1396 = vmatprep.subr.mxu0 %v1366
        %1397 = vmatpush1.msra.mxu0 %v1365
        %1398 = vmatprep.subr.mxu0 %v1368
        %1399 = vmatpush1.msra.mxu0 %v1367
        %1400 = vmatprep.subr.mxu0 %v1370
        %1401 = vmatpush1.msra.mxu0 %v1369
        %1402 = vmatprep.subr.mxu0 %v1372
        %1403 = vmatpush1.msra.mxu0 %v1371
        %1404 = vmatprep.subr.mxu0 0.0
        %1405 = vmatpush1.msra.mxu0 0.0
        %1406 = vmatprep.subr.mxu0 0.0
        %1407 = vmatpush1.msra.mxu0 0.0
        %1408 = vmatprep.subr.mxu0 0.0
        %1409 = vmatpush1.msra.mxu0 0.0
        %1410 = vmatprep.subr.mxu0 0.0
        %1411 = vmatpush1.msra.mxu0 0.0
        %1412 = vmatprep.subr.mxu0 0.0
        %1413 = vmatpush1.msra.mxu0 0.0
        %1414 = vmatprep.subr.mxu0 0.0
        %1415 = vmatpush1.msra.mxu0 0.0
        %1416 = vmatprep.subr.mxu0 0.0
        %1417 = vmatpush1.msra.mxu0 0.0
        %1418 = vmatprep.subr.mxu0 0.0
        %1419 = vmatpush1.msra.mxu0 0.0
        %1420 = vmatprep.subr.mxu0 0.0
        %1421 = vmatpush1.msra.mxu0 0.0
        %1422 = vmatprep.subr.mxu0 0.0
        %1423 = vmatpush1.msra.mxu0 0.0
        %1424 = vmatprep.subr.mxu0 0.0
        %1425 = vmatpush1.msra.mxu0 0.0
        %1426 = vmatprep.subr.mxu0 0.0
        %1427 = vmatpush1.msra.mxu0 0.0
        %1428 = vmatprep.subr.mxu0 0.0
        %1429 = vmatpush1.msra.mxu0 0.0
        %1430 = vmatprep.subr.mxu0 0.0
        %1431 = vmatpush1.msra.mxu0 0.0
        %1432 = vmatprep.subr.mxu0 0.0
        %1433 = vmatpush1.msra.mxu0 0.0
        %1434 = vmatprep.subr.mxu0 0.0
        %1435 = vmatpush1.msra.mxu0 0.0
        %1436 = vmatprep.subr.mxu0 0.0
        %1437 = vmatpush1.msra.mxu0 0.0
        %1438 = vmatprep.subr.mxu0 0.0
        %1439 = vmatpush1.msra.mxu0 0.0
        %1440 = vmatprep.subr.mxu0 0.0
        %1441 = vmatpush1.msra.mxu0 0.0
        %1442 = vmatprep.subr.mxu0 0.0
        %1443 = vmatpush1.msra.mxu0 0.0
        %1444 = vmatprep.subr.mxu0 0.0
        %1445 = vmatpush1.msra.mxu0 0.0
        %1446 = vmatprep.subr.mxu0 0.0
        %1447 = vmatpush1.msra.mxu0 0.0
        %1448 = vmatprep.subr.mxu0 0.0
        %1449 = vmatpush1.msra.mxu0 0.0
        %1450 = vmatprep.subr.mxu0 0.0
        %1451 = vmatpush1.msra.mxu0 0.0
        %1452 = vmatprep.mubr.f32.mxu0 0.0
        %1453 = vmatmul.mubr.f32.gmra.mrb[0].mxu0 %v1386
        %v1454 = vpop.f32.mrb[0].mxu0
        %v1455 = vadd.f32 %v1378, %v1454
        %v1456 = vpop.f32.mrb[0].mxu0
        %v1457 = vadd.f32 %v1382, %v1456
        %1458 = vdwg.mxu0
        %v1459 = vmax.f32 %v1455, 0.0
        %v1460 = vmax.f32 %v1457, 0.0
        %v1461 = vld [vmem:[%s11] sm:$0xff]
        %v1462 = vld [vmem:[%s11 + $0x8] sm:$0xff]
        %v1463 = vld [vmem:[%s11 + $0x10] sm:$0xff]
        %v1464 = vld [vmem:[%s11 + $0x18] sm:$0xff]
        %v1465 = vld [vmem:[%s11 + $0x20] sm:$0xff]
        %v1466 = vld [vmem:[%s11 + $0x28] sm:$0xff]
        %v1467 = vld [vmem:[%s11 + $0x30] sm:$0xff]
        %v1468 = vld [vmem:[%s11 + $0x38] sm:$0xff]
        %v1469 = vld [vmem:[%s11 + $0x40] sm:$0xff]
        %v1470 = vld [vmem:[%s11 + $0x48] sm:$0xff]
        %v1471 = vld [vmem:[%s11 + $0x50] sm:$0xff]
        %v1472 = vld [vmem:[%s11 + $0x58] sm:$0xff]
        %v1473 = vld [vmem:[%s11 + $0x60] sm:$0xff]
        %v1474 = vld [vmem:[%s11 + $0x68] sm:$0xff]
        %v1475 = vld [vmem:[%s11 + $0x70] sm:$0xff]
        %v1476 = vld [vmem:[%s11 + $0x78] sm:$0xff]
        %v1477 = vld [vmem:[%s11 + $0x80] sm:$0xff]
        %v1478 = vld [vmem:[%s11 + $0x88] sm:$0xff]
        %v1479 = vld [vmem:[%s11 + $0x90] sm:$0xff]
        %v1480 = vld [vmem:[%s11 + $0x98] sm:$0xff]
        %v1481 = vld [vmem:[%s11 + $0xa0] sm:$0xff]
        %v1482 = vld [vmem:[%s11 + $0xa8] sm:$0xff]
        %v1483 = vld [vmem:[%s11 + $0xb0] sm:$0xff]
        %v1484 = vld [vmem:[%s11 + $0xb8] sm:$0xff]
        %v1485 = vld [vmem:[%s11 + $0xc0] sm:$0xff]
        %v1486 = vld [vmem:[%s11 + $0xc8] sm:$0xff]
        %v1487 = vld [vmem:[%s11 + $0xd0] sm:$0xff]
        %v1488 = vld [vmem:[%s11 + $0xd8] sm:$0xff]
        %v1489 = vld [vmem:[%s11 + $0xe0] sm:$0xff]
        %v1490 = vld [vmem:[%s11 + $0xe8] sm:$0xff]
        %v1491 = vld [vmem:[%s11 + $0xf0] sm:$0xff]
        %v1492 = vld [vmem:[%s11 + $0xf8] sm:$0xff]
        %v1493 = vld [vmem:[%s12] sm:$0x1]
        %v1495 = vlaneseq
        %v1496 = vshrl.u32 %v1495, 7
        %v1497 = vsub.s32 0, %v1496
        %v1498 = vrot.slane %v1493, %v1497
        %1500 = vmatprep.subr.mxu0 0.0
        %1501 = vmatpush1.msra.mxu0 %v1461
        %1502 = vmatprep.subr.mxu0 0.0
        %1503 = vmatpush1.msra.mxu0 %v1462
        %1504 = vmatprep.subr.mxu0 0.0
        %1505 = vmatpush1.msra.mxu0 %v1463
        %1506 = vmatprep.subr.mxu0 0.0
        %1507 = vmatpush1.msra.mxu0 %v1464
        %1508 = vmatprep.subr.mxu0 0.0
        %1509 = vmatpush1.msra.mxu0 %v1465
        %1510 = vmatprep.subr.mxu0 0.0
        %1511 = vmatpush1.msra.mxu0 %v1466
        %1512 = vmatprep.subr.mxu0 0.0
        %1513 = vmatpush1.msra.mxu0 %v1467
        %1514 = vmatprep.subr.mxu0 0.0
        %1515 = vmatpush1.msra.mxu0 %v1468
        %1516 = vmatprep.subr.mxu0 0.0
        %1517 = vmatpush1.msra.mxu0 %v1469
        %1518 = vmatprep.subr.mxu0 0.0
        %1519 = vmatpush1.msra.mxu0 %v1470
        %1520 = vmatprep.subr.mxu0 0.0
        %1521 = vmatpush1.msra.mxu0 %v1471
        %1522 = vmatprep.subr.mxu0 0.0
        %1523 = vmatpush1.msra.mxu0 %v1472
        %1524 = vmatprep.subr.mxu0 0.0
        %1525 = vmatpush1.msra.mxu0 %v1473
        %1526 = vmatprep.subr.mxu0 0.0
        %1527 = vmatpush1.msra.mxu0 %v1474
        %1528 = vmatprep.subr.mxu0 0.0
        %1529 = vmatpush1.msra.mxu0 %v1475
        %1530 = vmatprep.subr.mxu0 0.0
        %1531 = vmatpush1.msra.mxu0 %v1476
        %1532 = vmatprep.subr.mxu0 0.0
        %1533 = vmatpush1.msra.mxu0 %v1477
        %1534 = vmatprep.subr.mxu0 0.0
        %1535 = vmatpush1.msra.mxu0 %v1478
        %1536 = vmatprep.subr.mxu0 0.0
        %1537 = vmatpush1.msra.mxu0 %v1479
        %1538 = vmatprep.subr.mxu0 0.0
        %1539 = vmatpush1.msra.mxu0 %v1480
        %1540 = vmatprep.subr.mxu0 0.0
        %1541 = vmatpush1.msra.mxu0 %v1481
        %1542 = vmatprep.subr.mxu0 0.0
        %1543 = vmatpush1.msra.mxu0 %v1482
        %1544 = vmatprep.subr.mxu0 0.0
        %1545 = vmatpush1.msra.mxu0 %v1483
        %1546 = vmatprep.subr.mxu0 0.0
        %1547 = vmatpush1.msra.mxu0 %v1484
        %1548 = vmatprep.subr.mxu0 0.0
        %1549 = vmatpush1.msra.mxu0 %v1485
        %1550 = vmatprep.subr.mxu0 0.0
        %1551 = vmatpush1.msra.mxu0 %v1486
        %1552 = vmatprep.subr.mxu0 0.0
        %1553 = vmatpush1.msra.mxu0 %v1487
        %1554 = vmatprep.subr.mxu0 0.0
        %1555 = vmatpush1.msra.mxu0 %v1488
        %1556 = vmatprep.subr.mxu0 0.0
        %1557 = vmatpush1.msra.mxu0 %v1489
        %1558 = vmatprep.subr.mxu0 0.0
        %1559 = vmatpush1.msra.mxu0 %v1490
        %1560 = vmatprep.subr.mxu0 0.0
        %1561 = vmatpush1.msra.mxu0 %v1491
        %1562 = vmatprep.subr.mxu0 0.0
        %1563 = vmatpush1.msra.mxu0 %v1492
        %1564 = vmatprep.mubr.f32.mxu0 %v1460
        %1565 = vmatmul.mubr.f32.gmra.mrb[0].mxu0 %v1459
        %v1566 = vpop.f32.mrb[0].mxu0
        %v1567 = vadd.f32 %v1498, %v1566
        %v1568 = vpop.f32.mrb[0].mxu0
        %1569 = vdwg.mxu0
        %v1570 = vadd.f32 %v1325, %v1567
        %1571 = vst.msk [vmem:[%s431] sm:$0xff] %vm439, %v1570
        %s1572 = sand.u32 %s313, 1
        %s1573 = scalar_lea.sflag [#allocation3], %s1572
        %s1574 = sand.u32 %s313, 1
        %s1575 = smul.addr %s1574, 8
        %s1576 = scalar_lea.vmem [#allocation2], %s1575
        // Predicated region
        $region73: #{tpu_custom_call.1} parent=71 // pred_check
          %p1577 = pneg %p323
        $region74: #{tpu_custom_call.1} parent=71 // pred_check_branch
          %1579 = sbr.rel (%p1577) target = $region76
        $region75: #{tpu_custom_call.1} parent=71 // pred_region
          %s1581 = ssub.s32 128, 128
          %1582 = vsyncadd %s1573, %s1581
          %s1583 = smul.addr %s27, 128
          %s1584 = scalar_lea.hbm %s13, %s1583
          %s1586 = sshll.u32 %s1576, 4
          %s1587 = int_to_ptr.vmem [resolvable:$true] %s1586
          %1589 = dma.vmem_to_hbm [thread:$0]  %s1587, 128, %s1584, %s1573
        $region76: #{tpu_custom_call.1} parent=71 // pred_fallthru
          _
      $region72: #{tpu_custom_call.1} parent=5 // pred_fallthru
        _
      %p1590 = scmp.le.s32.totalorder 2, %s22
      // Predicated region
      $region77: #{tpu_custom_call.1} parent=5 // pred_check
        %p1591 = pneg %p1590
      $region78: #{tpu_custom_call.1} parent=5 // pred_check_branch
        %1593 = sbr.rel (%p1591) target = $region80
      $region79: #{tpu_custom_call.1} parent=5 // pred_region
        %s1594 = ssub.s32 %s22, 2
        // Predicated region
        $region81: #{tpu_custom_call.1} parent=79 // pred_check
          %p1595 = pneg %p329
        $region82: #{tpu_custom_call.1} parent=79 // pred_check_branch
          %1597 = sbr.rel (%p1595) target = $region84
        $region83: #{tpu_custom_call.1} parent=79 // pred_region
          %s1598 = sand.u32 %s314, 1
          %s1599 = scalar_lea.sflag [#allocation3], %s1598
          %s1600 = sand.u32 %s314, 1
          %s1601 = smul.addr %s1600, 8
          %s1602 = scalar_lea.vmem [#allocation2], %s1601
          %1603 = dma.done %s1599, 128
        $region84: #{tpu_custom_call.1} parent=79 // pred_fallthru
          _
      $region80: #{tpu_custom_call.1} parent=5 // pred_fallthru
        _
    $region6: #{tpu_custom_call.1} parent=1 // loop_footer
      %s26 = sadd.s32 1, %s22
    $region7: #{tpu_custom_call.1} parent=1 // loop_footer_branch
      %21 = sbr.rel target = $region3
    $region8: #{tpu_custom_call.1} parent=1 // loop_exit
      _
    %1604 = vsyncpa [#allocation3], 1
    %s1605 = scalar_lea.sflag [#allocation3], 1
    %1606 = vsyncpa %s1605, 1

</llo_original>
